<compile_context>
chip_gen: v7x
topology: tpu7x:2x2x1
jax: 0.10.0
libtpu: 0.0.40
codegen_flags: <defaults>
</compile_context>

<pallas_src>
import math
import functools

import jax
import jax.numpy as jnp
from jax.experimental import pallas as pl
from jax.experimental.pallas import tpu as pltpu

_INV_SQRT2 = 1.0 / math.sqrt(2.0)
_LN_EPS = 1e-12


def _bert_head_transform_kernel(x_ref, w_ref, b_ref, g_ref, beta_ref, o_ref):
    # x_ref: (bm, H) [bf16]   w_ref: (H, H) [bf16]
    # b_ref / g_ref / beta_ref: (1, H) [f32]   o_ref: (bm, H) [caller dtype]

    # Dense: bf16 operands on the MXU, f32 accumulation.
    y = jnp.dot(x_ref[...], w_ref[...], preferred_element_type=jnp.float32)
    y = y + b_ref[...]

    # Exact-erf GELU (matches the PyTorch reference), f32 epilogue.
    y = y * 0.5 * (1.0 + jax.lax.erf(y * _INV_SQRT2))

    # LayerNorm over the hidden axis: fused mean / mean-of-squares (one XLU
    # pass fewer), biased variance, EUP-routed rsqrt.
    mu = jnp.mean(y, axis=-1, keepdims=True)
    ms = jnp.mean(y * y, axis=-1, keepdims=True)
    var = jnp.maximum(ms - mu * mu, 0.0)
    inv = jax.lax.rsqrt(var + _LN_EPS)
    o_ref[...] = ((y - mu) * inv * g_ref[...] + beta_ref[...]).astype(o_ref.dtype)


def _round_up(a, b):
    return (a + b - 1) // b * b


def _pick_block_m(m, block_m):
    """Row tile: big for throughput, but always >= 2 grid steps (ideally an
    even count) so v7x's two TensorCores both get work."""
    if m <= 8:
        return m  # single block equal to the full array dim (allowed)
    bm = min(block_m, _round_up(m, 8))
    if pl.cdiv(m, bm) < 2:
        bm = _round_up(pl.cdiv(m, 2), 8)
    grid_m = pl.cdiv(m, bm)
    if 1 < grid_m <= 16 and grid_m % 2 == 1:
        bm2 = _round_up(pl.cdiv(m, grid_m + 1), 8)
        if pl.cdiv(m, bm2) % 2 == 0:
            bm = bm2
    return bm


@functools.partial(jax.jit, static_argnames=("block_m", "use_bf16_matmul"))
def bert_prediction_head_transform(x, w, b, gamma, beta, *,
                                   block_m=512, use_bf16_matmul=True):
    """x: (batch, seq, hidden); w: (hidden, hidden) in (in, out) orientation."""
    batch, seq, hidden = x.shape
    m = batch * seq

    bm = _pick_block_m(m, block_m)
    grid_m = pl.cdiv(m, bm)

    mm_dtype = jnp.bfloat16 if use_bf16_matmul else x.dtype
    out_dtype = x.dtype

    x2 = x.reshape(m, hidden).astype(mm_dtype)
    w2 = w.astype(mm_dtype)
    b2 = b.reshape(1, hidden).astype(jnp.float32)
    g2 = gamma.reshape(1, hidden).astype(jnp.float32)
    beta2 = beta.reshape(1, hidden).astype(jnp.float32)

    mm_item = jnp.dtype(mm_dtype).itemsize
    out_item = jnp.dtype(out_dtype).itemsize

    # Explicit scoped-VMEM budget: double-buffered x/out tiles, 2x W (the
    # constant index_map only DMAs it once but two buffers are allocated),
    # f32 intermediates + headroom.  Keeps v5e's 16 MiB default from
    # degrading pipelining; comfortably under v7x's 64 MiB part.
    vmem_est = (2 * bm * hidden * mm_item          # x tiles
                + 2 * bm * hidden * out_item       # out tiles
                + 2 * hidden * hidden * mm_item    # W buffers
                + 4 * bm * hidden * 4              # f32 y + epilogue temporaries
                + 3 * 2 * hidden * 4)              # bias / gamma / beta
    vmem_limit = int(min(max(int(1.5 * vmem_est), 16 * 1024 * 1024),
                         64 * 1024 * 1024))

    cost = pl.CostEstimate(
        # erf lowers to a VALU polynomial on TPU -> count it as flops.
        flops=2 * m * hidden * hidden + 30 * m * hidden,
        transcendentals=m,                         # rsqrt per row
        bytes_accessed=(m * hidden * (mm_item + out_item)
                        + hidden * hidden * mm_item + 3 * hidden * 4),
    )

    out = pl.pallas_call(
        _bert_head_transform_kernel,
        out_shape=jax.ShapeDtypeStruct((m, hidden), out_dtype),
        grid_spec=pltpu.PrefetchScalarGridSpec(
            num_scalar_prefetch=0,
            grid=(grid_m,),
            in_specs=[
                pl.BlockSpec((bm, hidden), lambda i: (i, 0)),       # x rows
                pl.BlockSpec((hidden, hidden), lambda i: (0, 0)),   # W (resident; constant
                                                                    # index_map => no re-DMA)
                pl.BlockSpec((1, hidden), lambda i: (0, 0)),        # bias (f32)
                pl.BlockSpec((1, hidden), lambda i: (0, 0)),        # ln gamma (f32)
                pl.BlockSpec((1, hidden), lambda i: (0, 0)),        # ln beta (f32)
            ],
            out_specs=pl.BlockSpec((bm, hidden), lambda i: (i, 0)),
        ),
        compiler_params=pltpu.CompilerParams(
            dimension_semantics=("parallel",),
            vmem_limit_bytes=vmem_limit,
        ),
        cost_estimate=cost,
    )(x2, w2, b2, g2, beta2)

    return out.reshape(batch, seq, hidden)


def _reference(x, w, b, gamma, beta):
    y = jnp.einsum("bsh,hk->bsk",
                   x.astype(jnp.float32), w.astype(jnp.float32),
                   precision=jax.lax.Precision.HIGHEST) + b
    y = y * 0.5 * (1.0 + jax.lax.erf(y / math.sqrt(2.0)))
    mu = jnp.mean(y, axis=-1, keepdims=True)
    var = jnp.mean((y - mu) ** 2, axis=-1, keepdims=True)
    return (y - mu) / jnp.sqrt(var + _LN_EPS) * gamma + beta


if __name__ == "__main__":
    hidden_size = 768      # fixed by the module's __init__
    batch, seq = 2, 8

    key = jax.random.PRNGKey(0)
    kx, kw, kb = jax.random.split(key, 3)

    # nn.Linear(768, 768): weight/bias ~ U(-1/sqrt(in), 1/sqrt(in)); stored
    # directly in (in, out) orientation so the kernel computes x @ W + b.
    bound = 1.0 / math.sqrt(hidden_size)
    w = jax.random.uniform(kw, (hidden_size, hidden_size),
                           minval=-bound, maxval=bound, dtype=jnp.float32)
    b = jax.random.uniform(kb, (hidden_size,),
                           minval=-bound, maxval=bound, dtype=jnp.float32)
    # BertLayerNorm params
    gamma = jnp.ones((hidden_size,), jnp.float32)
    beta = jnp.zeros((hidden_size,), jnp.float32)

    x = jax.random.normal(kx, (batch, seq, hidden_size), dtype=jnp.float32)

    out = bert_prediction_head_transform(x, w, b, gamma, beta)
    out = jax.block_until_ready(out)
    assert out.shape == (batch, seq, hidden_size)

    # Tight check against a reference fed the same bf16-rounded matmul
    # operands (isolates the kernel math from the intentional bf16 MXU feed).
    ref_bf16_ops = _reference(x.astype(jnp.bfloat16).astype(jnp.float32),
                              w.astype(jnp.bfloat16).astype(jnp.float32),
                              b, gamma, beta)
    assert jnp.allclose(out, ref_bf16_ops, atol=1e-3, rtol=1e-3), \
        "mismatch vs bf16-operand reference"

    # Looser check against the full-f32 module reference (bf16 operand
    # rounding in the matmul is the only divergence).
    ref_f32 = _reference(x, w, b, gamma, beta)
    assert jnp.allclose(out, ref_f32, atol=5e-2, rtol=5e-2), \
        "mismatch vs f32 reference"

    print("KERNEL_OK")
</pallas_src>

<mosaic_0001>
module attributes {stable_mosaic.version = 11 : i64} {
  func.func @_bert_head_transform_kernel(%arg0: i32, %arg1: memref<8x768xbf16, #tpu.memory_space<vmem>>, %arg2: memref<768x768xbf16, #tpu.memory_space<vmem>>, %arg3: memref<1x768xf32, #tpu.memory_space<vmem>>, %arg4: memref<1x768xf32, #tpu.memory_space<vmem>>, %arg5: memref<1x768xf32, #tpu.memory_space<vmem>>, %arg6: memref<8x768xf32, #tpu.memory_space<vmem>>) attributes {dimension_semantics = [#tpu.dimension_semantics<parallel>], iteration_bounds = array<i64: 2>, scalar_prefetch = 0 : i64, scratch_operands = 0 : i64, tpu.core_type = #tpu.core_type<tc>, window_params = [{transform_indices = @transform_0, window_bounds = array<i64: 8, 768>}, {pipeline_mode = #tpu.pipeline_mode<synchronous>, transform_indices = @transform_1, window_bounds = array<i64: 768, 768>}, {pipeline_mode = #tpu.pipeline_mode<synchronous>, transform_indices = @transform_2, window_bounds = array<i64: 1, 768>}, {pipeline_mode = #tpu.pipeline_mode<synchronous>, transform_indices = @transform_3, window_bounds = array<i64: 1, 768>}, {pipeline_mode = #tpu.pipeline_mode<synchronous>, transform_indices = @transform_4, window_bounds = array<i64: 1, 768>}, {transform_indices = @transform_5, window_bounds = array<i64: 8, 768>}]} {
    %c0 = arith.constant 0 : index
    %c0_0 = arith.constant 0 : index
    %0 = vector.load %arg1[%c0, %c0_0] : memref<8x768xbf16, #tpu.memory_space<vmem>>, vector<8x768xbf16>
    %c0_1 = arith.constant 0 : index
    %c0_2 = arith.constant 0 : index
    %1 = vector.load %arg2[%c0_1, %c0_2] : memref<768x768xbf16, #tpu.memory_space<vmem>>, vector<768x768xbf16>
    %cst = arith.constant dense<0.000000e+00> : vector<8x768xf32>
    %2 = tpu.matmul %0, %1, %cst {dimension_numbers = #tpu.dot_dimension_numbers<[1], [0], [0], [1], [0, 0, 1, 1], [], []>} : vector<8x768xbf16>, vector<768x768xbf16>, vector<8x768xf32> -> vector<8x768xf32>
    %c0_3 = arith.constant 0 : index
    %c0_4 = arith.constant 0 : index
    %3 = vector.load %arg3[%c0_3, %c0_4] : memref<1x768xf32, #tpu.memory_space<vmem>>, vector<1x768xf32>
    %4 = vector.broadcast %3 : vector<1x768xf32> to vector<8x768xf32>
    %5 = arith.addf %2, %4 : vector<8x768xf32>
    %cst_5 = arith.constant 5.000000e-01 : f32
    %6 = vector.broadcast %cst_5 : f32 to vector<8x768xf32>
    %7 = arith.mulf %5, %6 : vector<8x768xf32>
    %cst_6 = arith.constant 0.707106769 : f32
    %8 = vector.broadcast %cst_6 : f32 to vector<8x768xf32>
    %9 = arith.mulf %5, %8 : vector<8x768xf32>
    %10 = math.erf %9 : vector<8x768xf32>
    %cst_7 = arith.constant 1.000000e+00 : f32
    %11 = vector.broadcast %cst_7 : f32 to vector<8x768xf32>
    %12 = arith.addf %11, %10 : vector<8x768xf32>
    %13 = arith.mulf %7, %12 : vector<8x768xf32>
    %cst_8 = arith.constant dense<0.000000e+00> : vector<8xf32>
    %14 = vector.multi_reduction <add>, %13, %cst_8 [1] : vector<8x768xf32> to vector<8xf32>
    %15 = vector.shape_cast %14 : vector<8xf32> to vector<8x1xf32>
    %cst_9 = arith.constant 7.680000e+02 : f32
    %16 = vector.broadcast %cst_9 : f32 to vector<8x1xf32>
    %17 = arith.divf %15, %16 : vector<8x1xf32>
    %18 = arith.mulf %13, %13 : vector<8x768xf32>
    %cst_10 = arith.constant dense<0.000000e+00> : vector<8xf32>
    %19 = vector.multi_reduction <add>, %18, %cst_10 [1] : vector<8x768xf32> to vector<8xf32>
    %20 = vector.shape_cast %19 : vector<8xf32> to vector<8x1xf32>
    %cst_11 = arith.constant 7.680000e+02 : f32
    %21 = vector.broadcast %cst_11 : f32 to vector<8x1xf32>
    %22 = arith.divf %20, %21 : vector<8x1xf32>
    %23 = arith.mulf %17, %17 : vector<8x1xf32>
    %24 = arith.subf %22, %23 : vector<8x1xf32>
    %cst_12 = arith.constant 0.000000e+00 : f32
    %25 = vector.broadcast %cst_12 : f32 to vector<8x1xf32>
    %26 = arith.maximumf %24, %25 : vector<8x1xf32>
    %cst_13 = arith.constant 9.99999996E-13 : f32
    %27 = vector.broadcast %cst_13 : f32 to vector<8x1xf32>
    %28 = arith.addf %26, %27 : vector<8x1xf32>
    %29 = math.rsqrt %28 : vector<8x1xf32>
    %30 = vector.broadcast %17 : vector<8x1xf32> to vector<8x768xf32>
    %31 = arith.subf %13, %30 : vector<8x768xf32>
    %32 = vector.broadcast %29 : vector<8x1xf32> to vector<8x768xf32>
    %33 = arith.mulf %31, %32 : vector<8x768xf32>
    %c0_14 = arith.constant 0 : index
    %c0_15 = arith.constant 0 : index
    %34 = vector.load %arg4[%c0_14, %c0_15] : memref<1x768xf32, #tpu.memory_space<vmem>>, vector<1x768xf32>
    %35 = vector.broadcast %34 : vector<1x768xf32> to vector<8x768xf32>
    %36 = arith.mulf %33, %35 : vector<8x768xf32>
    %c0_16 = arith.constant 0 : index
    %c0_17 = arith.constant 0 : index
    %37 = vector.load %arg5[%c0_16, %c0_17] : memref<1x768xf32, #tpu.memory_space<vmem>>, vector<1x768xf32>
    %38 = vector.broadcast %37 : vector<1x768xf32> to vector<8x768xf32>
    %39 = arith.addf %36, %38 : vector<8x768xf32>
    %c0_18 = arith.constant 0 : index
    %c0_19 = arith.constant 0 : index
    %40 = vector.load %arg6[%c0_18, %c0_19] : memref<8x768xf32, #tpu.memory_space<vmem>>, vector<8x768xf32>
    tpu.vector_store %arg6[%c0_18, %c0_19], %39 {strides = array<i32>} : memref<8x768xf32, #tpu.memory_space<vmem>>, vector<8x768xf32>,
    return
  }
  func.func @transform_0(%arg0: i32) -> (i32, i32) {
    %c0_i32 = arith.constant 0 : i32
    %c0_i32_0 = arith.constant 0 : i32
    return %arg0, %c0_i32 : i32, i32
  }
  func.func @transform_1(%arg0: i32) -> (i32, i32) {
    %c0_i32 = arith.constant 0 : i32
    %c0_i32_0 = arith.constant 0 : i32
    %c0_i32_1 = arith.constant 0 : i32
    return %c0_i32, %c0_i32_0 : i32, i32
  }
  func.func @transform_2(%arg0: i32) -> (i32, i32) {
    %c0_i32 = arith.constant 0 : i32
    %c0_i32_0 = arith.constant 0 : i32
    %c0_i32_1 = arith.constant 0 : i32
    return %c0_i32, %c0_i32_0 : i32, i32
  }
  func.func @transform_3(%arg0: i32) -> (i32, i32) {
    %c0_i32 = arith.constant 0 : i32
    %c0_i32_0 = arith.constant 0 : i32
    %c0_i32_1 = arith.constant 0 : i32
    return %c0_i32, %c0_i32_0 : i32, i32
  }
  func.func @transform_4(%arg0: i32) -> (i32, i32) {
    %c0_i32 = arith.constant 0 : i32
    %c0_i32_0 = arith.constant 0 : i32
    %c0_i32_1 = arith.constant 0 : i32
    return %c0_i32, %c0_i32_0 : i32, i32
  }
  func.func @transform_5(%arg0: i32) -> (i32, i32) {
    %c0_i32 = arith.constant 0 : i32
    %c0_i32_0 = arith.constant 0 : i32
    return %arg0, %c0_i32 : i32, i32
  }
}

</mosaic_0001>

<llo_original>
// kernel: bert_prediction_head_transform.1
$region0: #{bert_prediction_head_transform.1}
  #allocation0 [shape = 'u32[]', space=smem, size = 0x4, offset = 0x4, fixed_abs, tag = 'smem constant byte address 0x4 - core index']
  #allocation1 [shape = 'u32[144,128]{1,0:T(1,128)}', space=vmem, size = 0x12000, scoped, tag = 'internal scratch']
  %s0 = inlined_call_operand.vmem [shape: bf16[16,768], index: 0, kind: input, shape index: {}]
  %s1 = inlined_call_operand.vmem [shape: bf16[768,768], index: 1, kind: input, shape index: {}]
  %s2 = inlined_call_operand.vmem [shape: f32[1,768], index: 2, kind: input, shape index: {}]
  %s3 = inlined_call_operand.vmem [shape: f32[1,768], index: 3, kind: input, shape index: {}]
  %s4 = inlined_call_operand.vmem [shape: f32[1,768], index: 4, kind: input, shape index: {}]
  %s5 = inlined_call_operand.hbm [shape: f32[16,768], index: 5, kind: output, shape index: {}]
  %s6 = sld [smem:[#allocation0]]
  $region53: #{bert_prediction_head_transform.1} parent=0
    _
  %s8 = ssub.s32 1, %s6
  %s9 = scalar_select 0, %s8, %s6
  $region1: #{bert_prediction_head_transform.1} parent=0
    #allocation2 [shape = 'u8[49152]{0}', space=vmem, size = 0xc000, scoped, tag = 'output window, operand 0']
    #allocation3 [shape = 's32[2]{0}', space=sflag, size = 0x8, scoped, tag = 'scoped memory for bert_prediction_head_transform.1']
    %10 = vsyncpa [#allocation3], 0
    %s11 = scalar_lea.sflag [#allocation3], 1
    %12 = vsyncpa %s11, 0
    loop: start=0, step=1, limit=4
    $region2: #{bert_prediction_head_transform.1} parent=1 // loop_pre_header
      _
    $region3: #{bert_prediction_head_transform.1} parent=1 // loop_header
      %s14 = sphi 0, %s18
      %p15 = scmp.ge.s32.totalorder %s14, 4
      %s24 = sphi 0, %s26
      %s27 = sphi 0, %s24
      %s28 = sphi 0, %s27
      %s44 = sphi 0, %s28
      %s48 = sphi 0, %s48
      %s50 = sphi 0, %s48
      %s51 = sphi 0, %s50
      %s65 = sphi 0, %s51
      %s69 = sphi 0, %s69
      %s71 = sphi 0, %s69
      %s72 = sphi 0, %s71
      %s86 = sphi 0, %s72
      %s90 = sphi 0, %s90
      %s92 = sphi 0, %s90
      %s93 = sphi 0, %s92
      %s107 = sphi 0, %s93
      %s111 = sphi 0, %s111
      %s113 = sphi 0, %s111
      %s114 = sphi 0, %s113
      %s128 = sphi 0, %s114
      %s134 = sphi 0, %s136
      %s137 = sphi 0, %s134
      %s138 = sphi 0, %s137
      %s154 = sphi 0, %s138
    $region4: #{bert_prediction_head_transform.1} parent=1 // loop_header_branch
      %17 = sbr.rel (%p15) target = $region8
    $region5: #{bert_prediction_head_transform.1} parent=1 // loop_body
      %s19 = ssub.s32 %s14, 1
      %s20 = ssub.s32 %s14, 2
      %s21 = sadd.s32 %s14, 1
      %s22 = ssub.s32 %s14, %s21
      %p23 = scmp.eq.s32.totalorder %s22, 0
      %s25 = sadd.s32 %s24, 1
      %s26 = scalar_select %p23, %s24, %s25
      %p29 = pneg %p23
      %p30 = scmp.eq.s32.totalorder %s14, 1
      %p31 = por %p29, %p30
      %p32 = scmp.ne.s32.totalorder %s24, %s27
      %p33 = scmp.eq.s32.totalorder %s14, 0
      %p34 = por %p32, %p33
      %p35 = scmp.ne.s32.totalorder %s24, %s27
      %p36 = scmp.eq.s32.totalorder %s19, 1
      %p37 = por %p35, %p36
      %p38 = scmp.ne.s32.totalorder %s27, %s28
      %p39 = scmp.eq.s32.totalorder %s19, 0
      %p40 = por %p38, %p39
      %p41 = scmp.ne.s32.totalorder %s27, %s28
      %p42 = scmp.eq.s32.totalorder %s20, 1
      %p43 = por %p41, %p42
      %p45 = scmp.ne.s32.totalorder %s28, %s44
      %p46 = scmp.eq.s32.totalorder %s20, 0
      %p47 = por %p45, %p46
      %s49 = sadd.s32 %s48, 1
      %p52 = scmp.eq.s32.totalorder %s14, 1
      %p53 = scmp.ne.s32.totalorder %s48, %s50
      %p54 = scmp.eq.s32.totalorder %s14, 0
      %p55 = por %p53, %p54
      %p56 = scmp.ne.s32.totalorder %s48, %s50
      %p57 = scmp.eq.s32.totalorder %s19, 1
      %p58 = por %p56, %p57
      %p59 = scmp.ne.s32.totalorder %s50, %s51
      %p60 = scmp.eq.s32.totalorder %s19, 0
      %p61 = por %p59, %p60
      %p62 = scmp.ne.s32.totalorder %s50, %s51
      %p63 = scmp.eq.s32.totalorder %s20, 1
      %p64 = por %p62, %p63
      %p66 = scmp.ne.s32.totalorder %s51, %s65
      %p67 = scmp.eq.s32.totalorder %s20, 0
      %p68 = por %p66, %p67
      %s70 = sadd.s32 %s69, 1
      %p73 = scmp.eq.s32.totalorder %s14, 1
      %p74 = scmp.ne.s32.totalorder %s69, %s71
      %p75 = scmp.eq.s32.totalorder %s14, 0
      %p76 = por %p74, %p75
      %p77 = scmp.ne.s32.totalorder %s69, %s71
      %p78 = scmp.eq.s32.totalorder %s19, 1
      %p79 = por %p77, %p78
      %p80 = scmp.ne.s32.totalorder %s71, %s72
      %p81 = scmp.eq.s32.totalorder %s19, 0
      %p82 = por %p80, %p81
      %p83 = scmp.ne.s32.totalorder %s71, %s72
      %p84 = scmp.eq.s32.totalorder %s20, 1
      %p85 = por %p83, %p84
      %p87 = scmp.ne.s32.totalorder %s72, %s86
      %p88 = scmp.eq.s32.totalorder %s20, 0
      %p89 = por %p87, %p88
      %s91 = sadd.s32 %s90, 1
      %p94 = scmp.eq.s32.totalorder %s14, 1
      %p95 = scmp.ne.s32.totalorder %s90, %s92
      %p96 = scmp.eq.s32.totalorder %s14, 0
      %p97 = por %p95, %p96
      %p98 = scmp.ne.s32.totalorder %s90, %s92
      %p99 = scmp.eq.s32.totalorder %s19, 1
      %p100 = por %p98, %p99
      %p101 = scmp.ne.s32.totalorder %s92, %s93
      %p102 = scmp.eq.s32.totalorder %s19, 0
      %p103 = por %p101, %p102
      %p104 = scmp.ne.s32.totalorder %s92, %s93
      %p105 = scmp.eq.s32.totalorder %s20, 1
      %p106 = por %p104, %p105
      %p108 = scmp.ne.s32.totalorder %s93, %s107
      %p109 = scmp.eq.s32.totalorder %s20, 0
      %p110 = por %p108, %p109
      %s112 = sadd.s32 %s111, 1
      %p115 = scmp.eq.s32.totalorder %s14, 1
      %p116 = scmp.ne.s32.totalorder %s111, %s113
      %p117 = scmp.eq.s32.totalorder %s14, 0
      %p118 = por %p116, %p117
      %p119 = scmp.ne.s32.totalorder %s111, %s113
      %p120 = scmp.eq.s32.totalorder %s19, 1
      %p121 = por %p119, %p120
      %p122 = scmp.ne.s32.totalorder %s113, %s114
      %p123 = scmp.eq.s32.totalorder %s19, 0
      %p124 = por %p122, %p123
      %p125 = scmp.ne.s32.totalorder %s113, %s114
      %p126 = scmp.eq.s32.totalorder %s20, 1
      %p127 = por %p125, %p126
      %p129 = scmp.ne.s32.totalorder %s114, %s128
      %p130 = scmp.eq.s32.totalorder %s20, 0
      %p131 = por %p129, %p130
      %s132 = ssub.s32 %s14, %s21
      %p133 = scmp.eq.s32.totalorder %s132, 0
      %s135 = sadd.s32 %s134, 1
      %s136 = scalar_select %p133, %s134, %s135
      %p139 = pneg %p133
      %p140 = scmp.eq.s32.totalorder %s14, 1
      %p141 = por %p139, %p140
      %p142 = scmp.ne.s32.totalorder %s134, %s137
      %p143 = scmp.eq.s32.totalorder %s14, 0
      %p144 = por %p142, %p143
      %p145 = scmp.ne.s32.totalorder %s134, %s137
      %p146 = scmp.eq.s32.totalorder %s19, 1
      %p147 = por %p145, %p146
      %p148 = scmp.ne.s32.totalorder %s137, %s138
      %p149 = scmp.eq.s32.totalorder %s19, 0
      %p150 = por %p148, %p149
      %p151 = scmp.ne.s32.totalorder %s137, %s138
      %p152 = scmp.eq.s32.totalorder %s20, 1
      %p153 = por %p151, %p152
      %p155 = scmp.ne.s32.totalorder %s138, %s154
      %p156 = scmp.eq.s32.totalorder %s20, 0
      %p157 = por %p155, %p156
      %p158 = scmp.le.s32.totalorder 1, %s14
      %p159 = scmp.lt.s32.totalorder %s14, 3
      %p160 = pnand %p158, %p159
      %p161 = pneg %p160
      // Predicated region
      $region9: #{bert_prediction_head_transform.1} parent=5 // pred_check
        _
      $region10: #{bert_prediction_head_transform.1} parent=5 // pred_check_branch
        %163 = sbr.rel (%p160) target = $region12
      $region11: #{bert_prediction_head_transform.1} parent=5 // pred_region
        %s164 = ssub.s32 %s14, 1
        // Predicated region
        $region13: #{bert_prediction_head_transform.1} parent=11 // pred_check
          %p165 = pneg %p61
        $region14: #{bert_prediction_head_transform.1} parent=11 // pred_check_branch
          %167 = sbr.rel (%p165) target = $region16
        $region15: #{bert_prediction_head_transform.1} parent=11 // pred_region
          _
        $region16: #{bert_prediction_head_transform.1} parent=11 // pred_fallthru
          _
        // Predicated region
        $region17: #{bert_prediction_head_transform.1} parent=11 // pred_check
          %p168 = pneg %p82
        $region18: #{bert_prediction_head_transform.1} parent=11 // pred_check_branch
          %170 = sbr.rel (%p168) target = $region20
        $region19: #{bert_prediction_head_transform.1} parent=11 // pred_region
          _
        $region20: #{bert_prediction_head_transform.1} parent=11 // pred_fallthru
          _
        // Predicated region
        $region21: #{bert_prediction_head_transform.1} parent=11 // pred_check
          %p171 = pneg %p103
        $region22: #{bert_prediction_head_transform.1} parent=11 // pred_check_branch
          %173 = sbr.rel (%p171) target = $region24
        $region23: #{bert_prediction_head_transform.1} parent=11 // pred_region
          _
        $region24: #{bert_prediction_head_transform.1} parent=11 // pred_fallthru
          _
        // Predicated region
        $region25: #{bert_prediction_head_transform.1} parent=11 // pred_check
          %p174 = pneg %p124
        $region26: #{bert_prediction_head_transform.1} parent=11 // pred_check_branch
          %176 = sbr.rel (%p174) target = $region28
        $region27: #{bert_prediction_head_transform.1} parent=11 // pred_region
          _
        $region28: #{bert_prediction_head_transform.1} parent=11 // pred_fallthru
          _
      $region12: #{bert_prediction_head_transform.1} parent=5 // pred_fallthru
        _
      %p177 = scmp.lt.s32.totalorder %s14, 2
      // Predicated region
      $region29: #{bert_prediction_head_transform.1} parent=5 // pred_check
        %p178 = pneg %p177
      $region30: #{bert_prediction_head_transform.1} parent=5 // pred_check_branch
        %180 = sbr.rel (%p178) target = $region32
      $region31: #{bert_prediction_head_transform.1} parent=5 // pred_region
        // Predicated region
        $region33: #{bert_prediction_head_transform.1} parent=31 // pred_check
          %p181 = pneg %p34
        $region34: #{bert_prediction_head_transform.1} parent=31 // pred_check_branch
          %183 = sbr.rel (%p181) target = $region36
        $region35: #{bert_prediction_head_transform.1} parent=31 // pred_region
          %p184 = scmp.lt.s32.totalorder %s14, 1
          %s185 = scalar_select %p184, %s14, 1
          %s186 = smul.addr %s185, 6
          %s187 = smul.addr %s186, 4
          %s188 = scalar_lea.vmem %s0, %s187
        $region36: #{bert_prediction_head_transform.1} parent=31 // pred_fallthru
          _
      $region32: #{bert_prediction_head_transform.1} parent=5 // pred_fallthru
        _
      %p189 = scmp.le.s32.totalorder 1, %s14
      %p190 = scmp.lt.s32.totalorder %s14, 3
      %p191 = pnand %p189, %p190
      %p192 = pneg %p191
      // Predicated region
      $region37: #{bert_prediction_head_transform.1} parent=5 // pred_check
        _
      $region38: #{bert_prediction_head_transform.1} parent=5 // pred_check_branch
        %194 = sbr.rel (%p191) target = $region40
      $region39: #{bert_prediction_head_transform.1} parent=5 // pred_region
        %s195 = ssub.s32 %s14, 1
        %p196 = scmp.lt.s32.totalorder %s19, 1
        %s197 = scalar_select %p196, %s19, 1
        %s198 = smul.addr %s197, 6
        %s199 = smul.addr %s198, 4
        %s200 = scalar_lea.vmem %s0, %s199
        %p201 = pneg %p40
        %p202 = pneg %p37
        %p203 = pneg %p61
        %p204 = pneg %p58
        %p205 = pneg %p82
        %p206 = pneg %p79
        %p207 = pneg %p103
        %p208 = pneg %p100
        %p209 = pneg %p124
        %p210 = pneg %p121
        %p211 = pneg %p150
        %p212 = pneg %p147
        %s213 = sand.u32 %s137, 1
        %s214 = scalar_lea.sflag [#allocation3], %s213
        %s215 = sand.u32 %s137, 1
        %s216 = smul.addr %s215, 48
        %s217 = scalar_lea.vmem [#allocation2], %s216
        %p218 = scmp.lt.s32.totalorder %s19, 1
        %s219 = scalar_select %p218, %s19, 1
        %s220 = smul.addr %s219, 6
        %s221 = smul.addr %s220, 4
        %s222 = scalar_lea.vmem %s0, %s221
        %v223 = vld [vmem:[%s222] sm:$0xff]
        %v224 = vld [vmem:[%s222 + $0x8] sm:$0xff]
        %v225 = vld [vmem:[%s222 + $0x10] sm:$0xff]
        %v226 = vld [vmem:[%s1] sm:$0xff]
        %v227 = vld [vmem:[%s1 + $0x8] sm:$0xff]
        %v228 = vld [vmem:[%s1 + $0x10] sm:$0xff]
        %v229 = vld [vmem:[%s1 + $0x18] sm:$0xff]
        %v230 = vld [vmem:[%s1 + $0x20] sm:$0xff]
        %v231 = vld [vmem:[%s1 + $0x28] sm:$0xff]
        %v232 = vld [vmem:[%s1 + $0x30] sm:$0xff]
        %v233 = vld [vmem:[%s1 + $0x38] sm:$0xff]
        %v234 = vld [vmem:[%s1 + $0x40] sm:$0xff]
        %v235 = vld [vmem:[%s1 + $0x48] sm:$0xff]
        %v236 = vld [vmem:[%s1 + $0x50] sm:$0xff]
        %v237 = vld [vmem:[%s1 + $0x58] sm:$0xff]
        %v238 = vld [vmem:[%s1 + $0x60] sm:$0xff]
        %v239 = vld [vmem:[%s1 + $0x68] sm:$0xff]
        %v240 = vld [vmem:[%s1 + $0x70] sm:$0xff]
        %v241 = vld [vmem:[%s1 + $0x78] sm:$0xff]
        %v242 = vld [vmem:[%s1 + $0x80] sm:$0xff]
        %v243 = vld [vmem:[%s1 + $0x88] sm:$0xff]
        %v244 = vld [vmem:[%s1 + $0x90] sm:$0xff]
        %v245 = vld [vmem:[%s1 + $0x98] sm:$0xff]
        %v246 = vld [vmem:[%s1 + $0xa0] sm:$0xff]
        %v247 = vld [vmem:[%s1 + $0xa8] sm:$0xff]
        %v248 = vld [vmem:[%s1 + $0xb0] sm:$0xff]
        %v249 = vld [vmem:[%s1 + $0xb8] sm:$0xff]
        %v250 = vld [vmem:[%s1 + $0xc0] sm:$0xff]
        %v251 = vld [vmem:[%s1 + $0xc8] sm:$0xff]
        %v252 = vld [vmem:[%s1 + $0xd0] sm:$0xff]
        %v253 = vld [vmem:[%s1 + $0xd8] sm:$0xff]
        %v254 = vld [vmem:[%s1 + $0xe0] sm:$0xff]
        %v255 = vld [vmem:[%s1 + $0xe8] sm:$0xff]
        %v256 = vld [vmem:[%s1 + $0xf0] sm:$0xff]
        %v257 = vld [vmem:[%s1 + $0xf8] sm:$0xff]
        %v258 = vld [vmem:[%s1 + $0x100] sm:$0xff]
        %v259 = vld [vmem:[%s1 + $0x108] sm:$0xff]
        %v260 = vld [vmem:[%s1 + $0x110] sm:$0xff]
        %v261 = vld [vmem:[%s1 + $0x118] sm:$0xff]
        %v262 = vld [vmem:[%s1 + $0x120] sm:$0xff]
        %v263 = vld [vmem:[%s1 + $0x128] sm:$0xff]
        %v264 = vld [vmem:[%s1 + $0x130] sm:$0xff]
        %v265 = vld [vmem:[%s1 + $0x138] sm:$0xff]
        %v266 = vld [vmem:[%s1 + $0x140] sm:$0xff]
        %v267 = vld [vmem:[%s1 + $0x148] sm:$0xff]
        %v268 = vld [vmem:[%s1 + $0x150] sm:$0xff]
        %v269 = vld [vmem:[%s1 + $0x158] sm:$0xff]
        %v270 = vld [vmem:[%s1 + $0x160] sm:$0xff]
        %v271 = vld [vmem:[%s1 + $0x168] sm:$0xff]
        %v272 = vld [vmem:[%s1 + $0x170] sm:$0xff]
        %v273 = vld [vmem:[%s1 + $0x178] sm:$0xff]
        %v274 = vld [vmem:[%s1 + $0x180] sm:$0xff]
        %v275 = vld [vmem:[%s1 + $0x188] sm:$0xff]
        %v276 = vld [vmem:[%s1 + $0x190] sm:$0xff]
        %v277 = vld [vmem:[%s1 + $0x198] sm:$0xff]
        %v278 = vld [vmem:[%s1 + $0x1a0] sm:$0xff]
        %v279 = vld [vmem:[%s1 + $0x1a8] sm:$0xff]
        %v280 = vld [vmem:[%s1 + $0x1b0] sm:$0xff]
        %v281 = vld [vmem:[%s1 + $0x1b8] sm:$0xff]
        %v282 = vld [vmem:[%s1 + $0x1c0] sm:$0xff]
        %v283 = vld [vmem:[%s1 + $0x1c8] sm:$0xff]
        %v284 = vld [vmem:[%s1 + $0x1d0] sm:$0xff]
        %v285 = vld [vmem:[%s1 + $0x1d8] sm:$0xff]
        %v286 = vld [vmem:[%s1 + $0x1e0] sm:$0xff]
        %v287 = vld [vmem:[%s1 + $0x1e8] sm:$0xff]
        %v288 = vld [vmem:[%s1 + $0x1f0] sm:$0xff]
        %v289 = vld [vmem:[%s1 + $0x1f8] sm:$0xff]
        %v290 = vld [vmem:[%s1 + $0x200] sm:$0xff]
        %v291 = vld [vmem:[%s1 + $0x208] sm:$0xff]
        %v292 = vld [vmem:[%s1 + $0x210] sm:$0xff]
        %v293 = vld [vmem:[%s1 + $0x218] sm:$0xff]
        %v294 = vld [vmem:[%s1 + $0x220] sm:$0xff]
        %v295 = vld [vmem:[%s1 + $0x228] sm:$0xff]
        %v296 = vld [vmem:[%s1 + $0x230] sm:$0xff]
        %v297 = vld [vmem:[%s1 + $0x238] sm:$0xff]
        %v298 = vld [vmem:[%s1 + $0x240] sm:$0xff]
        %v299 = vld [vmem:[%s1 + $0x248] sm:$0xff]
        %v300 = vld [vmem:[%s1 + $0x250] sm:$0xff]
        %v301 = vld [vmem:[%s1 + $0x258] sm:$0xff]
        %v302 = vld [vmem:[%s1 + $0x260] sm:$0xff]
        %v303 = vld [vmem:[%s1 + $0x268] sm:$0xff]
        %v304 = vld [vmem:[%s1 + $0x270] sm:$0xff]
        %v305 = vld [vmem:[%s1 + $0x278] sm:$0xff]
        %v306 = vld [vmem:[%s1 + $0x280] sm:$0xff]
        %v307 = vld [vmem:[%s1 + $0x288] sm:$0xff]
        %v308 = vld [vmem:[%s1 + $0x290] sm:$0xff]
        %v309 = vld [vmem:[%s1 + $0x298] sm:$0xff]
        %v310 = vld [vmem:[%s1 + $0x2a0] sm:$0xff]
        %v311 = vld [vmem:[%s1 + $0x2a8] sm:$0xff]
        %v312 = vld [vmem:[%s1 + $0x2b0] sm:$0xff]
        %v313 = vld [vmem:[%s1 + $0x2b8] sm:$0xff]
        %v314 = vld [vmem:[%s1 + $0x2c0] sm:$0xff]
        %v315 = vld [vmem:[%s1 + $0x2c8] sm:$0xff]
        %v316 = vld [vmem:[%s1 + $0x2d0] sm:$0xff]
        %v317 = vld [vmem:[%s1 + $0x2d8] sm:$0xff]
        %v318 = vld [vmem:[%s1 + $0x2e0] sm:$0xff]
        %v319 = vld [vmem:[%s1 + $0x2e8] sm:$0xff]
        %v320 = vld [vmem:[%s1 + $0x2f0] sm:$0xff]
        %v321 = vld [vmem:[%s1 + $0x2f8] sm:$0xff]
        %v322 = vld [vmem:[%s1 + $0x300] sm:$0xff]
        %v323 = vld [vmem:[%s1 + $0x308] sm:$0xff]
        %v324 = vld [vmem:[%s1 + $0x310] sm:$0xff]
        %v325 = vld [vmem:[%s1 + $0x318] sm:$0xff]
        %v326 = vld [vmem:[%s1 + $0x320] sm:$0xff]
        %v327 = vld [vmem:[%s1 + $0x328] sm:$0xff]
        %v328 = vld [vmem:[%s1 + $0x330] sm:$0xff]
        %v329 = vld [vmem:[%s1 + $0x338] sm:$0xff]
        %v330 = vld [vmem:[%s1 + $0x340] sm:$0xff]
        %v331 = vld [vmem:[%s1 + $0x348] sm:$0xff]
        %v332 = vld [vmem:[%s1 + $0x350] sm:$0xff]
        %v333 = vld [vmem:[%s1 + $0x358] sm:$0xff]
        %v334 = vld [vmem:[%s1 + $0x360] sm:$0xff]
        %v335 = vld [vmem:[%s1 + $0x368] sm:$0xff]
        %v336 = vld [vmem:[%s1 + $0x370] sm:$0xff]
        %v337 = vld [vmem:[%s1 + $0x378] sm:$0xff]
        %v338 = vld [vmem:[%s1 + $0x380] sm:$0xff]
        %v339 = vld [vmem:[%s1 + $0x388] sm:$0xff]
        %v340 = vld [vmem:[%s1 + $0x390] sm:$0xff]
        %v341 = vld [vmem:[%s1 + $0x398] sm:$0xff]
        %v342 = vld [vmem:[%s1 + $0x3a0] sm:$0xff]
        %v343 = vld [vmem:[%s1 + $0x3a8] sm:$0xff]
        %v344 = vld [vmem:[%s1 + $0x3b0] sm:$0xff]
        %v345 = vld [vmem:[%s1 + $0x3b8] sm:$0xff]
        %v346 = vld [vmem:[%s1 + $0x3c0] sm:$0xff]
        %v347 = vld [vmem:[%s1 + $0x3c8] sm:$0xff]
        %v348 = vld [vmem:[%s1 + $0x3d0] sm:$0xff]
        %v349 = vld [vmem:[%s1 + $0x3d8] sm:$0xff]
        %v350 = vld [vmem:[%s1 + $0x3e0] sm:$0xff]
        %v351 = vld [vmem:[%s1 + $0x3e8] sm:$0xff]
        %v352 = vld [vmem:[%s1 + $0x3f0] sm:$0xff]
        %v353 = vld [vmem:[%s1 + $0x3f8] sm:$0xff]
        %v354 = vld [vmem:[%s1 + $0x400] sm:$0xff]
        %v355 = vld [vmem:[%s1 + $0x408] sm:$0xff]
        %v356 = vld [vmem:[%s1 + $0x410] sm:$0xff]
        %v357 = vld [vmem:[%s1 + $0x418] sm:$0xff]
        %v358 = vld [vmem:[%s1 + $0x420] sm:$0xff]
        %v359 = vld [vmem:[%s1 + $0x428] sm:$0xff]
        %v360 = vld [vmem:[%s1 + $0x430] sm:$0xff]
        %v361 = vld [vmem:[%s1 + $0x438] sm:$0xff]
        %v362 = vld [vmem:[%s1 + $0x440] sm:$0xff]
        %v363 = vld [vmem:[%s1 + $0x448] sm:$0xff]
        %v364 = vld [vmem:[%s1 + $0x450] sm:$0xff]
        %v365 = vld [vmem:[%s1 + $0x458] sm:$0xff]
        %v366 = vld [vmem:[%s1 + $0x460] sm:$0xff]
        %v367 = vld [vmem:[%s1 + $0x468] sm:$0xff]
        %v368 = vld [vmem:[%s1 + $0x470] sm:$0xff]
        %v369 = vld [vmem:[%s1 + $0x478] sm:$0xff]
        %v370 = vld [vmem:[%s1 + $0x480] sm:$0xff]
        %v371 = vld [vmem:[%s1 + $0x488] sm:$0xff]
        %v372 = vld [vmem:[%s1 + $0x490] sm:$0xff]
        %v373 = vld [vmem:[%s1 + $0x498] sm:$0xff]
        %v374 = vld [vmem:[%s1 + $0x4a0] sm:$0xff]
        %v375 = vld [vmem:[%s1 + $0x4a8] sm:$0xff]
        %v376 = vld [vmem:[%s1 + $0x4b0] sm:$0xff]
        %v377 = vld [vmem:[%s1 + $0x4b8] sm:$0xff]
        %v378 = vld [vmem:[%s1 + $0x4c0] sm:$0xff]
        %v379 = vld [vmem:[%s1 + $0x4c8] sm:$0xff]
        %v380 = vld [vmem:[%s1 + $0x4d0] sm:$0xff]
        %v381 = vld [vmem:[%s1 + $0x4d8] sm:$0xff]
        %v382 = vld [vmem:[%s1 + $0x4e0] sm:$0xff]
        %v383 = vld [vmem:[%s1 + $0x4e8] sm:$0xff]
        %v384 = vld [vmem:[%s1 + $0x4f0] sm:$0xff]
        %v385 = vld [vmem:[%s1 + $0x4f8] sm:$0xff]
        %v386 = vld [vmem:[%s1 + $0x500] sm:$0xff]
        %v387 = vld [vmem:[%s1 + $0x508] sm:$0xff]
        %v388 = vld [vmem:[%s1 + $0x510] sm:$0xff]
        %v389 = vld [vmem:[%s1 + $0x518] sm:$0xff]
        %v390 = vld [vmem:[%s1 + $0x520] sm:$0xff]
        %v391 = vld [vmem:[%s1 + $0x528] sm:$0xff]
        %v392 = vld [vmem:[%s1 + $0x530] sm:$0xff]
        %v393 = vld [vmem:[%s1 + $0x538] sm:$0xff]
        %v394 = vld [vmem:[%s1 + $0x540] sm:$0xff]
        %v395 = vld [vmem:[%s1 + $0x548] sm:$0xff]
        %v396 = vld [vmem:[%s1 + $0x550] sm:$0xff]
        %v397 = vld [vmem:[%s1 + $0x558] sm:$0xff]
        %v398 = vld [vmem:[%s1 + $0x560] sm:$0xff]
        %v399 = vld [vmem:[%s1 + $0x568] sm:$0xff]
        %v400 = vld [vmem:[%s1 + $0x570] sm:$0xff]
        %v401 = vld [vmem:[%s1 + $0x578] sm:$0xff]
        %v402 = vld [vmem:[%s1 + $0x580] sm:$0xff]
        %v403 = vld [vmem:[%s1 + $0x588] sm:$0xff]
        %v404 = vld [vmem:[%s1 + $0x590] sm:$0xff]
        %v405 = vld [vmem:[%s1 + $0x598] sm:$0xff]
        %v406 = vld [vmem:[%s1 + $0x5a0] sm:$0xff]
        %v407 = vld [vmem:[%s1 + $0x5a8] sm:$0xff]
        %v408 = vld [vmem:[%s1 + $0x5b0] sm:$0xff]
        %v409 = vld [vmem:[%s1 + $0x5b8] sm:$0xff]
        %v410 = vld [vmem:[%s1 + $0x5c0] sm:$0xff]
        %v411 = vld [vmem:[%s1 + $0x5c8] sm:$0xff]
        %v412 = vld [vmem:[%s1 + $0x5d0] sm:$0xff]
        %v413 = vld [vmem:[%s1 + $0x5d8] sm:$0xff]
        %v414 = vld [vmem:[%s1 + $0x5e0] sm:$0xff]
        %v415 = vld [vmem:[%s1 + $0x5e8] sm:$0xff]
        %v416 = vld [vmem:[%s1 + $0x5f0] sm:$0xff]
        %v417 = vld [vmem:[%s1 + $0x5f8] sm:$0xff]
        %v418 = vld [vmem:[%s1 + $0x600] sm:$0xff]
        %v419 = vld [vmem:[%s1 + $0x608] sm:$0xff]
        %v420 = vld [vmem:[%s1 + $0x610] sm:$0xff]
        %v421 = vld [vmem:[%s1 + $0x618] sm:$0xff]
        %v422 = vld [vmem:[%s1 + $0x620] sm:$0xff]
        %v423 = vld [vmem:[%s1 + $0x628] sm:$0xff]
        %v424 = vld [vmem:[%s1 + $0x630] sm:$0xff]
        %v425 = vld [vmem:[%s1 + $0x638] sm:$0xff]
        %v426 = vld [vmem:[%s1 + $0x640] sm:$0xff]
        %v427 = vld [vmem:[%s1 + $0x648] sm:$0xff]
        %v428 = vld [vmem:[%s1 + $0x650] sm:$0xff]
        %v429 = vld [vmem:[%s1 + $0x658] sm:$0xff]
        %v430 = vld [vmem:[%s1 + $0x660] sm:$0xff]
        %v431 = vld [vmem:[%s1 + $0x668] sm:$0xff]
        %v432 = vld [vmem:[%s1 + $0x670] sm:$0xff]
        %v433 = vld [vmem:[%s1 + $0x678] sm:$0xff]
        %v434 = vld [vmem:[%s1 + $0x680] sm:$0xff]
        %v435 = vld [vmem:[%s1 + $0x688] sm:$0xff]
        %v436 = vld [vmem:[%s1 + $0x690] sm:$0xff]
        %v437 = vld [vmem:[%s1 + $0x698] sm:$0xff]
        %v438 = vld [vmem:[%s1 + $0x6a0] sm:$0xff]
        %v439 = vld [vmem:[%s1 + $0x6a8] sm:$0xff]
        %v440 = vld [vmem:[%s1 + $0x6b0] sm:$0xff]
        %v441 = vld [vmem:[%s1 + $0x6b8] sm:$0xff]
        %v442 = vld [vmem:[%s1 + $0x6c0] sm:$0xff]
        %v443 = vld [vmem:[%s1 + $0x6c8] sm:$0xff]
        %v444 = vld [vmem:[%s1 + $0x6d0] sm:$0xff]
        %v445 = vld [vmem:[%s1 + $0x6d8] sm:$0xff]
        %v446 = vld [vmem:[%s1 + $0x6e0] sm:$0xff]
        %v447 = vld [vmem:[%s1 + $0x6e8] sm:$0xff]
        %v448 = vld [vmem:[%s1 + $0x6f0] sm:$0xff]
        %v449 = vld [vmem:[%s1 + $0x6f8] sm:$0xff]
        %v450 = vld [vmem:[%s1 + $0x700] sm:$0xff]
        %v451 = vld [vmem:[%s1 + $0x708] sm:$0xff]
        %v452 = vld [vmem:[%s1 + $0x710] sm:$0xff]
        %v453 = vld [vmem:[%s1 + $0x718] sm:$0xff]
        %v454 = vld [vmem:[%s1 + $0x720] sm:$0xff]
        %v455 = vld [vmem:[%s1 + $0x728] sm:$0xff]
        %v456 = vld [vmem:[%s1 + $0x730] sm:$0xff]
        %v457 = vld [vmem:[%s1 + $0x738] sm:$0xff]
        %v458 = vld [vmem:[%s1 + $0x740] sm:$0xff]
        %v459 = vld [vmem:[%s1 + $0x748] sm:$0xff]
        %v460 = vld [vmem:[%s1 + $0x750] sm:$0xff]
        %v461 = vld [vmem:[%s1 + $0x758] sm:$0xff]
        %v462 = vld [vmem:[%s1 + $0x760] sm:$0xff]
        %v463 = vld [vmem:[%s1 + $0x768] sm:$0xff]
        %v464 = vld [vmem:[%s1 + $0x770] sm:$0xff]
        %v465 = vld [vmem:[%s1 + $0x778] sm:$0xff]
        %v466 = vld [vmem:[%s1 + $0x780] sm:$0xff]
        %v467 = vld [vmem:[%s1 + $0x788] sm:$0xff]
        %v468 = vld [vmem:[%s1 + $0x790] sm:$0xff]
        %v469 = vld [vmem:[%s1 + $0x798] sm:$0xff]
        %v470 = vld [vmem:[%s1 + $0x7a0] sm:$0xff]
        %v471 = vld [vmem:[%s1 + $0x7a8] sm:$0xff]
        %v472 = vld [vmem:[%s1 + $0x7b0] sm:$0xff]
        %v473 = vld [vmem:[%s1 + $0x7b8] sm:$0xff]
        %v474 = vld [vmem:[%s1 + $0x7c0] sm:$0xff]
        %v475 = vld [vmem:[%s1 + $0x7c8] sm:$0xff]
        %v476 = vld [vmem:[%s1 + $0x7d0] sm:$0xff]
        %v477 = vld [vmem:[%s1 + $0x7d8] sm:$0xff]
        %v478 = vld [vmem:[%s1 + $0x7e0] sm:$0xff]
        %v479 = vld [vmem:[%s1 + $0x7e8] sm:$0xff]
        %v480 = vld [vmem:[%s1 + $0x7f0] sm:$0xff]
        %v481 = vld [vmem:[%s1 + $0x7f8] sm:$0xff]
        %v482 = vld [vmem:[%s1 + $0x800] sm:$0xff]
        %v483 = vld [vmem:[%s1 + $0x808] sm:$0xff]
        %v484 = vld [vmem:[%s1 + $0x810] sm:$0xff]
        %v485 = vld [vmem:[%s1 + $0x818] sm:$0xff]
        %v486 = vld [vmem:[%s1 + $0x820] sm:$0xff]
        %v487 = vld [vmem:[%s1 + $0x828] sm:$0xff]
        %v488 = vld [vmem:[%s1 + $0x830] sm:$0xff]
        %v489 = vld [vmem:[%s1 + $0x838] sm:$0xff]
        %v490 = vld [vmem:[%s1 + $0x840] sm:$0xff]
        %v491 = vld [vmem:[%s1 + $0x848] sm:$0xff]
        %v492 = vld [vmem:[%s1 + $0x850] sm:$0xff]
        %v493 = vld [vmem:[%s1 + $0x858] sm:$0xff]
        %v494 = vld [vmem:[%s1 + $0x860] sm:$0xff]
        %v495 = vld [vmem:[%s1 + $0x868] sm:$0xff]
        %v496 = vld [vmem:[%s1 + $0x870] sm:$0xff]
        %v497 = vld [vmem:[%s1 + $0x878] sm:$0xff]
        %v498 = vld [vmem:[%s1 + $0x880] sm:$0xff]
        %v499 = vld [vmem:[%s1 + $0x888] sm:$0xff]
        %v500 = vld [vmem:[%s1 + $0x890] sm:$0xff]
        %v501 = vld [vmem:[%s1 + $0x898] sm:$0xff]
        %v502 = vld [vmem:[%s1 + $0x8a0] sm:$0xff]
        %v503 = vld [vmem:[%s1 + $0x8a8] sm:$0xff]
        %v504 = vld [vmem:[%s1 + $0x8b0] sm:$0xff]
        %v505 = vld [vmem:[%s1 + $0x8b8] sm:$0xff]
        %v506 = vld [vmem:[%s1 + $0x8c0] sm:$0xff]
        %v507 = vld [vmem:[%s1 + $0x8c8] sm:$0xff]
        %v508 = vld [vmem:[%s1 + $0x8d0] sm:$0xff]
        %v509 = vld [vmem:[%s1 + $0x8d8] sm:$0xff]
        %v510 = vld [vmem:[%s1 + $0x8e0] sm:$0xff]
        %v511 = vld [vmem:[%s1 + $0x8e8] sm:$0xff]
        %v512 = vld [vmem:[%s1 + $0x8f0] sm:$0xff]
        %v513 = vld [vmem:[%s1 + $0x8f8] sm:$0xff]
        %v514 = vld [vmem:[%s2] sm:$0x3f]
        %v516 = vlaneseq
        %v517 = vshrl.u32 %v516, 7
        %v518 = vsub.s32 0, %v517
        %v519 = vrot.slane %v514, %v518
        %v520 = vlaneseq
        %v521 = vshrl.u32 %v520, 7
        %v522 = vsub.s32 1, %v521
        %v523 = vrot.slane %v514, %v522
        %v524 = vlaneseq
        %v525 = vshrl.u32 %v524, 7
        %v526 = vsub.s32 2, %v525
        %v527 = vrot.slane %v514, %v526
        %v528 = vlaneseq
        %v529 = vshrl.u32 %v528, 7
        %v530 = vsub.s32 3, %v529
        %v531 = vrot.slane %v514, %v530
        %v532 = vlaneseq
        %v533 = vshrl.u32 %v532, 7
        %v534 = vsub.s32 4, %v533
        %v535 = vrot.slane %v514, %v534
        %v536 = vlaneseq
        %v537 = vshrl.u32 %v536, 7
        %v538 = vsub.s32 5, %v537
        %v539 = vrot.slane %v514, %v538
        %v549 = vunpack.c.l.b16 %v223
        %v550 = vunpack.c.h.b16 %v223
        %v551 = vunpack.c.l.b16 %v224
        %v552 = vunpack.c.h.b16 %v224
        %v553 = vunpack.c.l.b16 %v225
        %v554 = vunpack.c.h.b16 %v225
        %v555 = vpack.c.b16 %v549, %v549
        %v556 = vpack.c.b16 %v550, %v550
        %v557 = vpack.c.b16 %v551, %v551
        %v558 = vpack.c.b16 %v552, %v552
        %v559 = vpack.c.b16 %v553, %v553
        %v560 = vpack.c.b16 %v554, %v554
        %v855 = vunpack.c.l.b16 %v226
        %v856 = vunpack.c.h.b16 %v226
        %v857 = vunpack.c.l.b16 %v227
        %v858 = vunpack.c.h.b16 %v227
        %v859 = vunpack.c.l.b16 %v228
        %v860 = vunpack.c.h.b16 %v228
        %v861 = vunpack.c.l.b16 %v229
        %v862 = vunpack.c.h.b16 %v229
        %v863 = vunpack.c.l.b16 %v230
        %v864 = vunpack.c.h.b16 %v230
        %v865 = vunpack.c.l.b16 %v231
        %v866 = vunpack.c.h.b16 %v231
        %v867 = vunpack.c.l.b16 %v232
        %v868 = vunpack.c.h.b16 %v232
        %v869 = vunpack.c.l.b16 %v233
        %v870 = vunpack.c.h.b16 %v233
        %v871 = vunpack.c.l.b16 %v234
        %v872 = vunpack.c.h.b16 %v234
        %v873 = vunpack.c.l.b16 %v235
        %v874 = vunpack.c.h.b16 %v235
        %v875 = vunpack.c.l.b16 %v236
        %v876 = vunpack.c.h.b16 %v236
        %v877 = vunpack.c.l.b16 %v237
        %v878 = vunpack.c.h.b16 %v237
        %v879 = vunpack.c.l.b16 %v238
        %v880 = vunpack.c.h.b16 %v238
        %v881 = vunpack.c.l.b16 %v239
        %v882 = vunpack.c.h.b16 %v239
        %v883 = vunpack.c.l.b16 %v240
        %v884 = vunpack.c.h.b16 %v240
        %v885 = vunpack.c.l.b16 %v241
        %v886 = vunpack.c.h.b16 %v241
        %v887 = vunpack.c.l.b16 %v242
        %v888 = vunpack.c.h.b16 %v242
        %v889 = vunpack.c.l.b16 %v243
        %v890 = vunpack.c.h.b16 %v243
        %v891 = vunpack.c.l.b16 %v244
        %v892 = vunpack.c.h.b16 %v244
        %v893 = vunpack.c.l.b16 %v245
        %v894 = vunpack.c.h.b16 %v245
        %v895 = vunpack.c.l.b16 %v246
        %v896 = vunpack.c.h.b16 %v246
        %v897 = vunpack.c.l.b16 %v247
        %v898 = vunpack.c.h.b16 %v247
        %v899 = vunpack.c.l.b16 %v248
        %v900 = vunpack.c.h.b16 %v248
        %v901 = vunpack.c.l.b16 %v249
        %v902 = vunpack.c.h.b16 %v249
        %v903 = vunpack.c.l.b16 %v250
        %v904 = vunpack.c.h.b16 %v250
        %v905 = vunpack.c.l.b16 %v251
        %v906 = vunpack.c.h.b16 %v251
        %v907 = vunpack.c.l.b16 %v252
        %v908 = vunpack.c.h.b16 %v252
        %v909 = vunpack.c.l.b16 %v253
        %v910 = vunpack.c.h.b16 %v253
        %v911 = vunpack.c.l.b16 %v254
        %v912 = vunpack.c.h.b16 %v254
        %v913 = vunpack.c.l.b16 %v255
        %v914 = vunpack.c.h.b16 %v255
        %v915 = vunpack.c.l.b16 %v256
        %v916 = vunpack.c.h.b16 %v256
        %v917 = vunpack.c.l.b16 %v257
        %v918 = vunpack.c.h.b16 %v257
        %v919 = vunpack.c.l.b16 %v258
        %v920 = vunpack.c.h.b16 %v258
        %v921 = vunpack.c.l.b16 %v259
        %v922 = vunpack.c.h.b16 %v259
        %v923 = vunpack.c.l.b16 %v260
        %v924 = vunpack.c.h.b16 %v260
        %v925 = vunpack.c.l.b16 %v261
        %v926 = vunpack.c.h.b16 %v261
        %v927 = vunpack.c.l.b16 %v262
        %v928 = vunpack.c.h.b16 %v262
        %v929 = vunpack.c.l.b16 %v263
        %v930 = vunpack.c.h.b16 %v263
        %v931 = vunpack.c.l.b16 %v264
        %v932 = vunpack.c.h.b16 %v264
        %v933 = vunpack.c.l.b16 %v265
        %v934 = vunpack.c.h.b16 %v265
        %v935 = vunpack.c.l.b16 %v266
        %v936 = vunpack.c.h.b16 %v266
        %v937 = vunpack.c.l.b16 %v267
        %v938 = vunpack.c.h.b16 %v267
        %v939 = vunpack.c.l.b16 %v268
        %v940 = vunpack.c.h.b16 %v268
        %v941 = vunpack.c.l.b16 %v269
        %v942 = vunpack.c.h.b16 %v269
        %v943 = vunpack.c.l.b16 %v270
        %v944 = vunpack.c.h.b16 %v270
        %v945 = vunpack.c.l.b16 %v271
        %v946 = vunpack.c.h.b16 %v271
        %v947 = vunpack.c.l.b16 %v272
        %v948 = vunpack.c.h.b16 %v272
        %v949 = vunpack.c.l.b16 %v273
        %v950 = vunpack.c.h.b16 %v273
        %v951 = vunpack.c.l.b16 %v274
        %v952 = vunpack.c.h.b16 %v274
        %v953 = vunpack.c.l.b16 %v275
        %v954 = vunpack.c.h.b16 %v275
        %v955 = vunpack.c.l.b16 %v276
        %v956 = vunpack.c.h.b16 %v276
        %v957 = vunpack.c.l.b16 %v277
        %v958 = vunpack.c.h.b16 %v277
        %v959 = vunpack.c.l.b16 %v278
        %v960 = vunpack.c.h.b16 %v278
        %v961 = vunpack.c.l.b16 %v279
        %v962 = vunpack.c.h.b16 %v279
        %v963 = vunpack.c.l.b16 %v280
        %v964 = vunpack.c.h.b16 %v280
        %v965 = vunpack.c.l.b16 %v281
        %v966 = vunpack.c.h.b16 %v281
        %v967 = vunpack.c.l.b16 %v282
        %v968 = vunpack.c.h.b16 %v282
        %v969 = vunpack.c.l.b16 %v283
        %v970 = vunpack.c.h.b16 %v283
        %v971 = vunpack.c.l.b16 %v284
        %v972 = vunpack.c.h.b16 %v284
        %v973 = vunpack.c.l.b16 %v285
        %v974 = vunpack.c.h.b16 %v285
        %v975 = vunpack.c.l.b16 %v286
        %v976 = vunpack.c.h.b16 %v286
        %v977 = vunpack.c.l.b16 %v287
        %v978 = vunpack.c.h.b16 %v287
        %v979 = vunpack.c.l.b16 %v288
        %v980 = vunpack.c.h.b16 %v288
        %v981 = vunpack.c.l.b16 %v289
        %v982 = vunpack.c.h.b16 %v289
        %v983 = vunpack.c.l.b16 %v290
        %v984 = vunpack.c.h.b16 %v290
        %v985 = vunpack.c.l.b16 %v291
        %v986 = vunpack.c.h.b16 %v291
        %v987 = vunpack.c.l.b16 %v292
        %v988 = vunpack.c.h.b16 %v292
        %v989 = vunpack.c.l.b16 %v293
        %v990 = vunpack.c.h.b16 %v293
        %v991 = vunpack.c.l.b16 %v294
        %v992 = vunpack.c.h.b16 %v294
        %v993 = vunpack.c.l.b16 %v295
        %v994 = vunpack.c.h.b16 %v295
        %v995 = vunpack.c.l.b16 %v296
        %v996 = vunpack.c.h.b16 %v296
        %v997 = vunpack.c.l.b16 %v297
        %v998 = vunpack.c.h.b16 %v297
        %v999 = vunpack.c.l.b16 %v298
        %v1000 = vunpack.c.h.b16 %v298
        %v1001 = vunpack.c.l.b16 %v299
        %v1002 = vunpack.c.h.b16 %v299
        %v1003 = vunpack.c.l.b16 %v300
        %v1004 = vunpack.c.h.b16 %v300
        %v1005 = vunpack.c.l.b16 %v301
        %v1006 = vunpack.c.h.b16 %v301
        %v1007 = vunpack.c.l.b16 %v302
        %v1008 = vunpack.c.h.b16 %v302
        %v1009 = vunpack.c.l.b16 %v303
        %v1010 = vunpack.c.h.b16 %v303
        %v1011 = vunpack.c.l.b16 %v304
        %v1012 = vunpack.c.h.b16 %v304
        %v1013 = vunpack.c.l.b16 %v305
        %v1014 = vunpack.c.h.b16 %v305
        %v1015 = vunpack.c.l.b16 %v306
        %v1016 = vunpack.c.h.b16 %v306
        %v1017 = vunpack.c.l.b16 %v307
        %v1018 = vunpack.c.h.b16 %v307
        %v1019 = vunpack.c.l.b16 %v308
        %v1020 = vunpack.c.h.b16 %v308
        %v1021 = vunpack.c.l.b16 %v309
        %v1022 = vunpack.c.h.b16 %v309
        %v1023 = vunpack.c.l.b16 %v310
        %v1024 = vunpack.c.h.b16 %v310
        %v1025 = vunpack.c.l.b16 %v311
        %v1026 = vunpack.c.h.b16 %v311
        %v1027 = vunpack.c.l.b16 %v312
        %v1028 = vunpack.c.h.b16 %v312
        %v1029 = vunpack.c.l.b16 %v313
        %v1030 = vunpack.c.h.b16 %v313
        %v1031 = vunpack.c.l.b16 %v314
        %v1032 = vunpack.c.h.b16 %v314
        %v1033 = vunpack.c.l.b16 %v315
        %v1034 = vunpack.c.h.b16 %v315
        %v1035 = vunpack.c.l.b16 %v316
        %v1036 = vunpack.c.h.b16 %v316
        %v1037 = vunpack.c.l.b16 %v317
        %v1038 = vunpack.c.h.b16 %v317
        %v1039 = vunpack.c.l.b16 %v318
        %v1040 = vunpack.c.h.b16 %v318
        %v1041 = vunpack.c.l.b16 %v319
        %v1042 = vunpack.c.h.b16 %v319
        %v1043 = vunpack.c.l.b16 %v320
        %v1044 = vunpack.c.h.b16 %v320
        %v1045 = vunpack.c.l.b16 %v321
        %v1046 = vunpack.c.h.b16 %v321
        %v1047 = vunpack.c.l.b16 %v322
        %v1048 = vunpack.c.h.b16 %v322
        %v1049 = vunpack.c.l.b16 %v323
        %v1050 = vunpack.c.h.b16 %v323
        %v1051 = vunpack.c.l.b16 %v324
        %v1052 = vunpack.c.h.b16 %v324
        %v1053 = vunpack.c.l.b16 %v325
        %v1054 = vunpack.c.h.b16 %v325
        %v1055 = vunpack.c.l.b16 %v326
        %v1056 = vunpack.c.h.b16 %v326
        %v1057 = vunpack.c.l.b16 %v327
        %v1058 = vunpack.c.h.b16 %v327
        %v1059 = vunpack.c.l.b16 %v328
        %v1060 = vunpack.c.h.b16 %v328
        %v1061 = vunpack.c.l.b16 %v329
        %v1062 = vunpack.c.h.b16 %v329
        %v1063 = vunpack.c.l.b16 %v330
        %v1064 = vunpack.c.h.b16 %v330
        %v1065 = vunpack.c.l.b16 %v331
        %v1066 = vunpack.c.h.b16 %v331
        %v1067 = vunpack.c.l.b16 %v332
        %v1068 = vunpack.c.h.b16 %v332
        %v1069 = vunpack.c.l.b16 %v333
        %v1070 = vunpack.c.h.b16 %v333
        %v1071 = vunpack.c.l.b16 %v334
        %v1072 = vunpack.c.h.b16 %v334
        %v1073 = vunpack.c.l.b16 %v335
        %v1074 = vunpack.c.h.b16 %v335
        %v1075 = vunpack.c.l.b16 %v336
        %v1076 = vunpack.c.h.b16 %v336
        %v1077 = vunpack.c.l.b16 %v337
        %v1078 = vunpack.c.h.b16 %v337
        %v1079 = vunpack.c.l.b16 %v338
        %v1080 = vunpack.c.h.b16 %v338
        %v1081 = vunpack.c.l.b16 %v339
        %v1082 = vunpack.c.h.b16 %v339
        %v1083 = vunpack.c.l.b16 %v340
        %v1084 = vunpack.c.h.b16 %v340
        %v1085 = vunpack.c.l.b16 %v341
        %v1086 = vunpack.c.h.b16 %v341
        %v1087 = vunpack.c.l.b16 %v342
        %v1088 = vunpack.c.h.b16 %v342
        %v1089 = vunpack.c.l.b16 %v343
        %v1090 = vunpack.c.h.b16 %v343
        %v1091 = vunpack.c.l.b16 %v344
        %v1092 = vunpack.c.h.b16 %v344
        %v1093 = vunpack.c.l.b16 %v345
        %v1094 = vunpack.c.h.b16 %v345
        %v1095 = vunpack.c.l.b16 %v346
        %v1096 = vunpack.c.h.b16 %v346
        %v1097 = vunpack.c.l.b16 %v347
        %v1098 = vunpack.c.h.b16 %v347
        %v1099 = vunpack.c.l.b16 %v348
        %v1100 = vunpack.c.h.b16 %v348
        %v1101 = vunpack.c.l.b16 %v349
        %v1102 = vunpack.c.h.b16 %v349
        %v1103 = vunpack.c.l.b16 %v350
        %v1104 = vunpack.c.h.b16 %v350
        %v1105 = vunpack.c.l.b16 %v351
        %v1106 = vunpack.c.h.b16 %v351
        %v1107 = vunpack.c.l.b16 %v352
        %v1108 = vunpack.c.h.b16 %v352
        %v1109 = vunpack.c.l.b16 %v353
        %v1110 = vunpack.c.h.b16 %v353
        %v1111 = vunpack.c.l.b16 %v354
        %v1112 = vunpack.c.h.b16 %v354
        %v1113 = vunpack.c.l.b16 %v355
        %v1114 = vunpack.c.h.b16 %v355
        %v1115 = vunpack.c.l.b16 %v356
        %v1116 = vunpack.c.h.b16 %v356
        %v1117 = vunpack.c.l.b16 %v357
        %v1118 = vunpack.c.h.b16 %v357
        %v1119 = vunpack.c.l.b16 %v358
        %v1120 = vunpack.c.h.b16 %v358
        %v1121 = vunpack.c.l.b16 %v359
        %v1122 = vunpack.c.h.b16 %v359
        %v1123 = vunpack.c.l.b16 %v360
        %v1124 = vunpack.c.h.b16 %v360
        %v1125 = vunpack.c.l.b16 %v361
        %v1126 = vunpack.c.h.b16 %v361
        %v1127 = vunpack.c.l.b16 %v362
        %v1128 = vunpack.c.h.b16 %v362
        %v1129 = vunpack.c.l.b16 %v363
        %v1130 = vunpack.c.h.b16 %v363
        %v1131 = vunpack.c.l.b16 %v364
        %v1132 = vunpack.c.h.b16 %v364
        %v1133 = vunpack.c.l.b16 %v365
        %v1134 = vunpack.c.h.b16 %v365
        %v1135 = vunpack.c.l.b16 %v366
        %v1136 = vunpack.c.h.b16 %v366
        %v1137 = vunpack.c.l.b16 %v367
        %v1138 = vunpack.c.h.b16 %v367
        %v1139 = vunpack.c.l.b16 %v368
        %v1140 = vunpack.c.h.b16 %v368
        %v1141 = vunpack.c.l.b16 %v369
        %v1142 = vunpack.c.h.b16 %v369
        %v1143 = vunpack.c.l.b16 %v370
        %v1144 = vunpack.c.h.b16 %v370
        %v1145 = vunpack.c.l.b16 %v371
        %v1146 = vunpack.c.h.b16 %v371
        %v1147 = vunpack.c.l.b16 %v372
        %v1148 = vunpack.c.h.b16 %v372
        %v1149 = vunpack.c.l.b16 %v373
        %v1150 = vunpack.c.h.b16 %v373
        %v1151 = vunpack.c.l.b16 %v374
        %v1152 = vunpack.c.h.b16 %v374
        %v1153 = vunpack.c.l.b16 %v375
        %v1154 = vunpack.c.h.b16 %v375
        %v1155 = vunpack.c.l.b16 %v376
        %v1156 = vunpack.c.h.b16 %v376
        %v1157 = vunpack.c.l.b16 %v377
        %v1158 = vunpack.c.h.b16 %v377
        %v1159 = vunpack.c.l.b16 %v378
        %v1160 = vunpack.c.h.b16 %v378
        %v1161 = vunpack.c.l.b16 %v379
        %v1162 = vunpack.c.h.b16 %v379
        %v1163 = vunpack.c.l.b16 %v380
        %v1164 = vunpack.c.h.b16 %v380
        %v1165 = vunpack.c.l.b16 %v381
        %v1166 = vunpack.c.h.b16 %v381
        %v1167 = vunpack.c.l.b16 %v382
        %v1168 = vunpack.c.h.b16 %v382
        %v1169 = vunpack.c.l.b16 %v383
        %v1170 = vunpack.c.h.b16 %v383
        %v1171 = vunpack.c.l.b16 %v384
        %v1172 = vunpack.c.h.b16 %v384
        %v1173 = vunpack.c.l.b16 %v385
        %v1174 = vunpack.c.h.b16 %v385
        %v1175 = vunpack.c.l.b16 %v386
        %v1176 = vunpack.c.h.b16 %v386
        %v1177 = vunpack.c.l.b16 %v387
        %v1178 = vunpack.c.h.b16 %v387
        %v1179 = vunpack.c.l.b16 %v388
        %v1180 = vunpack.c.h.b16 %v388
        %v1181 = vunpack.c.l.b16 %v389
        %v1182 = vunpack.c.h.b16 %v389
        %v1183 = vunpack.c.l.b16 %v390
        %v1184 = vunpack.c.h.b16 %v390
        %v1185 = vunpack.c.l.b16 %v391
        %v1186 = vunpack.c.h.b16 %v391
        %v1187 = vunpack.c.l.b16 %v392
        %v1188 = vunpack.c.h.b16 %v392
        %v1189 = vunpack.c.l.b16 %v393
        %v1190 = vunpack.c.h.b16 %v393
        %v1191 = vunpack.c.l.b16 %v394
        %v1192 = vunpack.c.h.b16 %v394
        %v1193 = vunpack.c.l.b16 %v395
        %v1194 = vunpack.c.h.b16 %v395
        %v1195 = vunpack.c.l.b16 %v396
        %v1196 = vunpack.c.h.b16 %v396
        %v1197 = vunpack.c.l.b16 %v397
        %v1198 = vunpack.c.h.b16 %v397
        %v1199 = vunpack.c.l.b16 %v398
        %v1200 = vunpack.c.h.b16 %v398
        %v1201 = vunpack.c.l.b16 %v399
        %v1202 = vunpack.c.h.b16 %v399
        %v1203 = vunpack.c.l.b16 %v400
        %v1204 = vunpack.c.h.b16 %v400
        %v1205 = vunpack.c.l.b16 %v401
        %v1206 = vunpack.c.h.b16 %v401
        %v1207 = vunpack.c.l.b16 %v402
        %v1208 = vunpack.c.h.b16 %v402
        %v1209 = vunpack.c.l.b16 %v403
        %v1210 = vunpack.c.h.b16 %v403
        %v1211 = vunpack.c.l.b16 %v404
        %v1212 = vunpack.c.h.b16 %v404
        %v1213 = vunpack.c.l.b16 %v405
        %v1214 = vunpack.c.h.b16 %v405
        %v1215 = vunpack.c.l.b16 %v406
        %v1216 = vunpack.c.h.b16 %v406
        %v1217 = vunpack.c.l.b16 %v407
        %v1218 = vunpack.c.h.b16 %v407
        %v1219 = vunpack.c.l.b16 %v408
        %v1220 = vunpack.c.h.b16 %v408
        %v1221 = vunpack.c.l.b16 %v409
        %v1222 = vunpack.c.h.b16 %v409
        %v1223 = vunpack.c.l.b16 %v410
        %v1224 = vunpack.c.h.b16 %v410
        %v1225 = vunpack.c.l.b16 %v411
        %v1226 = vunpack.c.h.b16 %v411
        %v1227 = vunpack.c.l.b16 %v412
        %v1228 = vunpack.c.h.b16 %v412
        %v1229 = vunpack.c.l.b16 %v413
        %v1230 = vunpack.c.h.b16 %v413
        %v1231 = vunpack.c.l.b16 %v414
        %v1232 = vunpack.c.h.b16 %v414
        %v1233 = vunpack.c.l.b16 %v415
        %v1234 = vunpack.c.h.b16 %v415
        %v1235 = vunpack.c.l.b16 %v416
        %v1236 = vunpack.c.h.b16 %v416
        %v1237 = vunpack.c.l.b16 %v417
        %v1238 = vunpack.c.h.b16 %v417
        %v1239 = vunpack.c.l.b16 %v418
        %v1240 = vunpack.c.h.b16 %v418
        %v1241 = vunpack.c.l.b16 %v419
        %v1242 = vunpack.c.h.b16 %v419
        %v1243 = vunpack.c.l.b16 %v420
        %v1244 = vunpack.c.h.b16 %v420
        %v1245 = vunpack.c.l.b16 %v421
        %v1246 = vunpack.c.h.b16 %v421
        %v1247 = vunpack.c.l.b16 %v422
        %v1248 = vunpack.c.h.b16 %v422
        %v1249 = vunpack.c.l.b16 %v423
        %v1250 = vunpack.c.h.b16 %v423
        %v1251 = vunpack.c.l.b16 %v424
        %v1252 = vunpack.c.h.b16 %v424
        %v1253 = vunpack.c.l.b16 %v425
        %v1254 = vunpack.c.h.b16 %v425
        %v1255 = vunpack.c.l.b16 %v426
        %v1256 = vunpack.c.h.b16 %v426
        %v1257 = vunpack.c.l.b16 %v427
        %v1258 = vunpack.c.h.b16 %v427
        %v1259 = vunpack.c.l.b16 %v428
        %v1260 = vunpack.c.h.b16 %v428
        %v1261 = vunpack.c.l.b16 %v429
        %v1262 = vunpack.c.h.b16 %v429
        %v1263 = vunpack.c.l.b16 %v430
        %v1264 = vunpack.c.h.b16 %v430
        %v1265 = vunpack.c.l.b16 %v431
        %v1266 = vunpack.c.h.b16 %v431
        %v1267 = vunpack.c.l.b16 %v432
        %v1268 = vunpack.c.h.b16 %v432
        %v1269 = vunpack.c.l.b16 %v433
        %v1270 = vunpack.c.h.b16 %v433
        %v1271 = vunpack.c.l.b16 %v434
        %v1272 = vunpack.c.h.b16 %v434
        %v1273 = vunpack.c.l.b16 %v435
        %v1274 = vunpack.c.h.b16 %v435
        %v1275 = vunpack.c.l.b16 %v436
        %v1276 = vunpack.c.h.b16 %v436
        %v1277 = vunpack.c.l.b16 %v437
        %v1278 = vunpack.c.h.b16 %v437
        %v1279 = vunpack.c.l.b16 %v438
        %v1280 = vunpack.c.h.b16 %v438
        %v1281 = vunpack.c.l.b16 %v439
        %v1282 = vunpack.c.h.b16 %v439
        %v1283 = vunpack.c.l.b16 %v440
        %v1284 = vunpack.c.h.b16 %v440
        %v1285 = vunpack.c.l.b16 %v441
        %v1286 = vunpack.c.h.b16 %v441
        %v1287 = vunpack.c.l.b16 %v442
        %v1288 = vunpack.c.h.b16 %v442
        %v1289 = vunpack.c.l.b16 %v443
        %v1290 = vunpack.c.h.b16 %v443
        %v1291 = vunpack.c.l.b16 %v444
        %v1292 = vunpack.c.h.b16 %v444
        %v1293 = vunpack.c.l.b16 %v445
        %v1294 = vunpack.c.h.b16 %v445
        %v1295 = vunpack.c.l.b16 %v446
        %v1296 = vunpack.c.h.b16 %v446
        %v1297 = vunpack.c.l.b16 %v447
        %v1298 = vunpack.c.h.b16 %v447
        %v1299 = vunpack.c.l.b16 %v448
        %v1300 = vunpack.c.h.b16 %v448
        %v1301 = vunpack.c.l.b16 %v449
        %v1302 = vunpack.c.h.b16 %v449
        %v1303 = vunpack.c.l.b16 %v450
        %v1304 = vunpack.c.h.b16 %v450
        %v1305 = vunpack.c.l.b16 %v451
        %v1306 = vunpack.c.h.b16 %v451
        %v1307 = vunpack.c.l.b16 %v452
        %v1308 = vunpack.c.h.b16 %v452
        %v1309 = vunpack.c.l.b16 %v453
        %v1310 = vunpack.c.h.b16 %v453
        %v1311 = vunpack.c.l.b16 %v454
        %v1312 = vunpack.c.h.b16 %v454
        %v1313 = vunpack.c.l.b16 %v455
        %v1314 = vunpack.c.h.b16 %v455
        %v1315 = vunpack.c.l.b16 %v456
        %v1316 = vunpack.c.h.b16 %v456
        %v1317 = vunpack.c.l.b16 %v457
        %v1318 = vunpack.c.h.b16 %v457
        %v1319 = vunpack.c.l.b16 %v458
        %v1320 = vunpack.c.h.b16 %v458
        %v1321 = vunpack.c.l.b16 %v459
        %v1322 = vunpack.c.h.b16 %v459
        %v1323 = vunpack.c.l.b16 %v460
        %v1324 = vunpack.c.h.b16 %v460
        %v1325 = vunpack.c.l.b16 %v461
        %v1326 = vunpack.c.h.b16 %v461
        %v1327 = vunpack.c.l.b16 %v462
        %v1328 = vunpack.c.h.b16 %v462
        %v1329 = vunpack.c.l.b16 %v463
        %v1330 = vunpack.c.h.b16 %v463
        %v1331 = vunpack.c.l.b16 %v464
        %v1332 = vunpack.c.h.b16 %v464
        %v1333 = vunpack.c.l.b16 %v465
        %v1334 = vunpack.c.h.b16 %v465
        %v1335 = vunpack.c.l.b16 %v466
        %v1336 = vunpack.c.h.b16 %v466
        %v1337 = vunpack.c.l.b16 %v467
        %v1338 = vunpack.c.h.b16 %v467
        %v1339 = vunpack.c.l.b16 %v468
        %v1340 = vunpack.c.h.b16 %v468
        %v1341 = vunpack.c.l.b16 %v469
        %v1342 = vunpack.c.h.b16 %v469
        %v1343 = vunpack.c.l.b16 %v470
        %v1344 = vunpack.c.h.b16 %v470
        %v1345 = vunpack.c.l.b16 %v471
        %v1346 = vunpack.c.h.b16 %v471
        %v1347 = vunpack.c.l.b16 %v472
        %v1348 = vunpack.c.h.b16 %v472
        %v1349 = vunpack.c.l.b16 %v473
        %v1350 = vunpack.c.h.b16 %v473
        %v1351 = vunpack.c.l.b16 %v474
        %v1352 = vunpack.c.h.b16 %v474
        %v1353 = vunpack.c.l.b16 %v475
        %v1354 = vunpack.c.h.b16 %v475
        %v1355 = vunpack.c.l.b16 %v476
        %v1356 = vunpack.c.h.b16 %v476
        %v1357 = vunpack.c.l.b16 %v477
        %v1358 = vunpack.c.h.b16 %v477
        %v1359 = vunpack.c.l.b16 %v478
        %v1360 = vunpack.c.h.b16 %v478
        %v1361 = vunpack.c.l.b16 %v479
        %v1362 = vunpack.c.h.b16 %v479
        %v1363 = vunpack.c.l.b16 %v480
        %v1364 = vunpack.c.h.b16 %v480
        %v1365 = vunpack.c.l.b16 %v481
        %v1366 = vunpack.c.h.b16 %v481
        %v1367 = vunpack.c.l.b16 %v482
        %v1368 = vunpack.c.h.b16 %v482
        %v1369 = vunpack.c.l.b16 %v483
        %v1370 = vunpack.c.h.b16 %v483
        %v1371 = vunpack.c.l.b16 %v484
        %v1372 = vunpack.c.h.b16 %v484
        %v1373 = vunpack.c.l.b16 %v485
        %v1374 = vunpack.c.h.b16 %v485
        %v1375 = vunpack.c.l.b16 %v486
        %v1376 = vunpack.c.h.b16 %v486
        %v1377 = vunpack.c.l.b16 %v487
        %v1378 = vunpack.c.h.b16 %v487
        %v1379 = vunpack.c.l.b16 %v488
        %v1380 = vunpack.c.h.b16 %v488
        %v1381 = vunpack.c.l.b16 %v489
        %v1382 = vunpack.c.h.b16 %v489
        %v1383 = vunpack.c.l.b16 %v490
        %v1384 = vunpack.c.h.b16 %v490
        %v1385 = vunpack.c.l.b16 %v491
        %v1386 = vunpack.c.h.b16 %v491
        %v1387 = vunpack.c.l.b16 %v492
        %v1388 = vunpack.c.h.b16 %v492
        %v1389 = vunpack.c.l.b16 %v493
        %v1390 = vunpack.c.h.b16 %v493
        %v1391 = vunpack.c.l.b16 %v494
        %v1392 = vunpack.c.h.b16 %v494
        %v1393 = vunpack.c.l.b16 %v495
        %v1394 = vunpack.c.h.b16 %v495
        %v1395 = vunpack.c.l.b16 %v496
        %v1396 = vunpack.c.h.b16 %v496
        %v1397 = vunpack.c.l.b16 %v497
        %v1398 = vunpack.c.h.b16 %v497
        %v1399 = vunpack.c.l.b16 %v498
        %v1400 = vunpack.c.h.b16 %v498
        %v1401 = vunpack.c.l.b16 %v499
        %v1402 = vunpack.c.h.b16 %v499
        %v1403 = vunpack.c.l.b16 %v500
        %v1404 = vunpack.c.h.b16 %v500
        %v1405 = vunpack.c.l.b16 %v501
        %v1406 = vunpack.c.h.b16 %v501
        %v1407 = vunpack.c.l.b16 %v502
        %v1408 = vunpack.c.h.b16 %v502
        %v1409 = vunpack.c.l.b16 %v503
        %v1410 = vunpack.c.h.b16 %v503
        %v1411 = vunpack.c.l.b16 %v504
        %v1412 = vunpack.c.h.b16 %v504
        %v1413 = vunpack.c.l.b16 %v505
        %v1414 = vunpack.c.h.b16 %v505
        %v1415 = vunpack.c.l.b16 %v506
        %v1416 = vunpack.c.h.b16 %v506
        %v1417 = vunpack.c.l.b16 %v507
        %v1418 = vunpack.c.h.b16 %v507
        %v1419 = vunpack.c.l.b16 %v508
        %v1420 = vunpack.c.h.b16 %v508
        %v1421 = vunpack.c.l.b16 %v509
        %v1422 = vunpack.c.h.b16 %v509
        %v1423 = vunpack.c.l.b16 %v510
        %v1424 = vunpack.c.h.b16 %v510
        %v1425 = vunpack.c.l.b16 %v511
        %v1426 = vunpack.c.h.b16 %v511
        %v1427 = vunpack.c.l.b16 %v512
        %v1428 = vunpack.c.h.b16 %v512
        %v1429 = vunpack.c.l.b16 %v513
        %v1430 = vunpack.c.h.b16 %v513
        %v1431 = vpack.c.b16 %v861, %v855
        %v1432 = vpack.c.b16 %v862, %v856
        %v1433 = vpack.c.b16 %v863, %v857
        %v1434 = vpack.c.b16 %v864, %v858
        %v1435 = vpack.c.b16 %v865, %v859
        %v1436 = vpack.c.b16 %v866, %v860
        %v1437 = vpack.c.b16 %v873, %v867
        %v1438 = vpack.c.b16 %v874, %v868
        %v1439 = vpack.c.b16 %v875, %v869
        %v1440 = vpack.c.b16 %v876, %v870
        %v1441 = vpack.c.b16 %v877, %v871
        %v1442 = vpack.c.b16 %v878, %v872
        %v1443 = vpack.c.b16 %v885, %v879
        %v1444 = vpack.c.b16 %v886, %v880
        %v1445 = vpack.c.b16 %v887, %v881
        %v1446 = vpack.c.b16 %v888, %v882
        %v1447 = vpack.c.b16 %v889, %v883
        %v1448 = vpack.c.b16 %v890, %v884
        %v1449 = vpack.c.b16 %v897, %v891
        %v1450 = vpack.c.b16 %v898, %v892
        %v1451 = vpack.c.b16 %v899, %v893
        %v1452 = vpack.c.b16 %v900, %v894
        %v1453 = vpack.c.b16 %v901, %v895
        %v1454 = vpack.c.b16 %v902, %v896
        %v1455 = vpack.c.b16 %v909, %v903
        %v1456 = vpack.c.b16 %v910, %v904
        %v1457 = vpack.c.b16 %v911, %v905
        %v1458 = vpack.c.b16 %v912, %v906
        %v1459 = vpack.c.b16 %v913, %v907
        %v1460 = vpack.c.b16 %v914, %v908
        %v1461 = vpack.c.b16 %v921, %v915
        %v1462 = vpack.c.b16 %v922, %v916
        %v1463 = vpack.c.b16 %v923, %v917
        %v1464 = vpack.c.b16 %v924, %v918
        %v1465 = vpack.c.b16 %v925, %v919
        %v1466 = vpack.c.b16 %v926, %v920
        %v1467 = vpack.c.b16 %v933, %v927
        %v1468 = vpack.c.b16 %v934, %v928
        %v1469 = vpack.c.b16 %v935, %v929
        %v1470 = vpack.c.b16 %v936, %v930
        %v1471 = vpack.c.b16 %v937, %v931
        %v1472 = vpack.c.b16 %v938, %v932
        %v1473 = vpack.c.b16 %v945, %v939
        %v1474 = vpack.c.b16 %v946, %v940
        %v1475 = vpack.c.b16 %v947, %v941
        %v1476 = vpack.c.b16 %v948, %v942
        %v1477 = vpack.c.b16 %v949, %v943
        %v1478 = vpack.c.b16 %v950, %v944
        %v1479 = vpack.c.b16 %v957, %v951
        %v1480 = vpack.c.b16 %v958, %v952
        %v1481 = vpack.c.b16 %v959, %v953
        %v1482 = vpack.c.b16 %v960, %v954
        %v1483 = vpack.c.b16 %v961, %v955
        %v1484 = vpack.c.b16 %v962, %v956
        %v1485 = vpack.c.b16 %v969, %v963
        %v1486 = vpack.c.b16 %v970, %v964
        %v1487 = vpack.c.b16 %v971, %v965
        %v1488 = vpack.c.b16 %v972, %v966
        %v1489 = vpack.c.b16 %v973, %v967
        %v1490 = vpack.c.b16 %v974, %v968
        %v1491 = vpack.c.b16 %v981, %v975
        %v1492 = vpack.c.b16 %v982, %v976
        %v1493 = vpack.c.b16 %v983, %v977
        %v1494 = vpack.c.b16 %v984, %v978
        %v1495 = vpack.c.b16 %v985, %v979
        %v1496 = vpack.c.b16 %v986, %v980
        %v1497 = vpack.c.b16 %v993, %v987
        %v1498 = vpack.c.b16 %v994, %v988
        %v1499 = vpack.c.b16 %v995, %v989
        %v1500 = vpack.c.b16 %v996, %v990
        %v1501 = vpack.c.b16 %v997, %v991
        %v1502 = vpack.c.b16 %v998, %v992
        %v1503 = vpack.c.b16 %v1005, %v999
        %v1504 = vpack.c.b16 %v1006, %v1000
        %v1505 = vpack.c.b16 %v1007, %v1001
        %v1506 = vpack.c.b16 %v1008, %v1002
        %v1507 = vpack.c.b16 %v1009, %v1003
        %v1508 = vpack.c.b16 %v1010, %v1004
        %v1509 = vpack.c.b16 %v1017, %v1011
        %v1510 = vpack.c.b16 %v1018, %v1012
        %v1511 = vpack.c.b16 %v1019, %v1013
        %v1512 = vpack.c.b16 %v1020, %v1014
        %v1513 = vpack.c.b16 %v1021, %v1015
        %v1514 = vpack.c.b16 %v1022, %v1016
        %v1515 = vpack.c.b16 %v1029, %v1023
        %v1516 = vpack.c.b16 %v1030, %v1024
        %v1517 = vpack.c.b16 %v1031, %v1025
        %v1518 = vpack.c.b16 %v1032, %v1026
        %v1519 = vpack.c.b16 %v1033, %v1027
        %v1520 = vpack.c.b16 %v1034, %v1028
        %v1521 = vpack.c.b16 %v1041, %v1035
        %v1522 = vpack.c.b16 %v1042, %v1036
        %v1523 = vpack.c.b16 %v1043, %v1037
        %v1524 = vpack.c.b16 %v1044, %v1038
        %v1525 = vpack.c.b16 %v1045, %v1039
        %v1526 = vpack.c.b16 %v1046, %v1040
        %v1527 = vpack.c.b16 %v1053, %v1047
        %v1528 = vpack.c.b16 %v1054, %v1048
        %v1529 = vpack.c.b16 %v1055, %v1049
        %v1530 = vpack.c.b16 %v1056, %v1050
        %v1531 = vpack.c.b16 %v1057, %v1051
        %v1532 = vpack.c.b16 %v1058, %v1052
        %v1533 = vpack.c.b16 %v1065, %v1059
        %v1534 = vpack.c.b16 %v1066, %v1060
        %v1535 = vpack.c.b16 %v1067, %v1061
        %v1536 = vpack.c.b16 %v1068, %v1062
        %v1537 = vpack.c.b16 %v1069, %v1063
        %v1538 = vpack.c.b16 %v1070, %v1064
        %v1539 = vpack.c.b16 %v1077, %v1071
        %v1540 = vpack.c.b16 %v1078, %v1072
        %v1541 = vpack.c.b16 %v1079, %v1073
        %v1542 = vpack.c.b16 %v1080, %v1074
        %v1543 = vpack.c.b16 %v1081, %v1075
        %v1544 = vpack.c.b16 %v1082, %v1076
        %v1545 = vpack.c.b16 %v1089, %v1083
        %v1546 = vpack.c.b16 %v1090, %v1084
        %v1547 = vpack.c.b16 %v1091, %v1085
        %v1548 = vpack.c.b16 %v1092, %v1086
        %v1549 = vpack.c.b16 %v1093, %v1087
        %v1550 = vpack.c.b16 %v1094, %v1088
        %v1551 = vpack.c.b16 %v1101, %v1095
        %v1552 = vpack.c.b16 %v1102, %v1096
        %v1553 = vpack.c.b16 %v1103, %v1097
        %v1554 = vpack.c.b16 %v1104, %v1098
        %v1555 = vpack.c.b16 %v1105, %v1099
        %v1556 = vpack.c.b16 %v1106, %v1100
        %v1557 = vpack.c.b16 %v1113, %v1107
        %v1558 = vpack.c.b16 %v1114, %v1108
        %v1559 = vpack.c.b16 %v1115, %v1109
        %v1560 = vpack.c.b16 %v1116, %v1110
        %v1561 = vpack.c.b16 %v1117, %v1111
        %v1562 = vpack.c.b16 %v1118, %v1112
        %v1563 = vpack.c.b16 %v1125, %v1119
        %v1564 = vpack.c.b16 %v1126, %v1120
        %v1565 = vpack.c.b16 %v1127, %v1121
        %v1566 = vpack.c.b16 %v1128, %v1122
        %v1567 = vpack.c.b16 %v1129, %v1123
        %v1568 = vpack.c.b16 %v1130, %v1124
        %v1569 = vpack.c.b16 %v1137, %v1131
        %v1570 = vpack.c.b16 %v1138, %v1132
        %v1571 = vpack.c.b16 %v1139, %v1133
        %v1572 = vpack.c.b16 %v1140, %v1134
        %v1573 = vpack.c.b16 %v1141, %v1135
        %v1574 = vpack.c.b16 %v1142, %v1136
        %v1575 = vpack.c.b16 %v1149, %v1143
        %v1576 = vpack.c.b16 %v1150, %v1144
        %v1577 = vpack.c.b16 %v1151, %v1145
        %v1578 = vpack.c.b16 %v1152, %v1146
        %v1579 = vpack.c.b16 %v1153, %v1147
        %v1580 = vpack.c.b16 %v1154, %v1148
        %v1581 = vpack.c.b16 %v1161, %v1155
        %v1582 = vpack.c.b16 %v1162, %v1156
        %v1583 = vpack.c.b16 %v1163, %v1157
        %v1584 = vpack.c.b16 %v1164, %v1158
        %v1585 = vpack.c.b16 %v1165, %v1159
        %v1586 = vpack.c.b16 %v1166, %v1160
        %v1587 = vpack.c.b16 %v1173, %v1167
        %v1588 = vpack.c.b16 %v1174, %v1168
        %v1589 = vpack.c.b16 %v1175, %v1169
        %v1590 = vpack.c.b16 %v1176, %v1170
        %v1591 = vpack.c.b16 %v1177, %v1171
        %v1592 = vpack.c.b16 %v1178, %v1172
        %v1593 = vpack.c.b16 %v1185, %v1179
        %v1594 = vpack.c.b16 %v1186, %v1180
        %v1595 = vpack.c.b16 %v1187, %v1181
        %v1596 = vpack.c.b16 %v1188, %v1182
        %v1597 = vpack.c.b16 %v1189, %v1183
        %v1598 = vpack.c.b16 %v1190, %v1184
        %v1599 = vpack.c.b16 %v1197, %v1191
        %v1600 = vpack.c.b16 %v1198, %v1192
        %v1601 = vpack.c.b16 %v1199, %v1193
        %v1602 = vpack.c.b16 %v1200, %v1194
        %v1603 = vpack.c.b16 %v1201, %v1195
        %v1604 = vpack.c.b16 %v1202, %v1196
        %v1605 = vpack.c.b16 %v1209, %v1203
        %v1606 = vpack.c.b16 %v1210, %v1204
        %v1607 = vpack.c.b16 %v1211, %v1205
        %v1608 = vpack.c.b16 %v1212, %v1206
        %v1609 = vpack.c.b16 %v1213, %v1207
        %v1610 = vpack.c.b16 %v1214, %v1208
        %v1611 = vpack.c.b16 %v1221, %v1215
        %v1612 = vpack.c.b16 %v1222, %v1216
        %v1613 = vpack.c.b16 %v1223, %v1217
        %v1614 = vpack.c.b16 %v1224, %v1218
        %v1615 = vpack.c.b16 %v1225, %v1219
        %v1616 = vpack.c.b16 %v1226, %v1220
        %v1617 = vpack.c.b16 %v1233, %v1227
        %v1618 = vpack.c.b16 %v1234, %v1228
        %v1619 = vpack.c.b16 %v1235, %v1229
        %v1620 = vpack.c.b16 %v1236, %v1230
        %v1621 = vpack.c.b16 %v1237, %v1231
        %v1622 = vpack.c.b16 %v1238, %v1232
        %v1623 = vpack.c.b16 %v1245, %v1239
        %v1624 = vpack.c.b16 %v1246, %v1240
        %v1625 = vpack.c.b16 %v1247, %v1241
        %v1626 = vpack.c.b16 %v1248, %v1242
        %v1627 = vpack.c.b16 %v1249, %v1243
        %v1628 = vpack.c.b16 %v1250, %v1244
        %v1629 = vpack.c.b16 %v1257, %v1251
        %v1630 = vpack.c.b16 %v1258, %v1252
        %v1631 = vpack.c.b16 %v1259, %v1253
        %v1632 = vpack.c.b16 %v1260, %v1254
        %v1633 = vpack.c.b16 %v1261, %v1255
        %v1634 = vpack.c.b16 %v1262, %v1256
        %v1635 = vpack.c.b16 %v1269, %v1263
        %v1636 = vpack.c.b16 %v1270, %v1264
        %v1637 = vpack.c.b16 %v1271, %v1265
        %v1638 = vpack.c.b16 %v1272, %v1266
        %v1639 = vpack.c.b16 %v1273, %v1267
        %v1640 = vpack.c.b16 %v1274, %v1268
        %v1641 = vpack.c.b16 %v1281, %v1275
        %v1642 = vpack.c.b16 %v1282, %v1276
        %v1643 = vpack.c.b16 %v1283, %v1277
        %v1644 = vpack.c.b16 %v1284, %v1278
        %v1645 = vpack.c.b16 %v1285, %v1279
        %v1646 = vpack.c.b16 %v1286, %v1280
        %v1647 = vpack.c.b16 %v1293, %v1287
        %v1648 = vpack.c.b16 %v1294, %v1288
        %v1649 = vpack.c.b16 %v1295, %v1289
        %v1650 = vpack.c.b16 %v1296, %v1290
        %v1651 = vpack.c.b16 %v1297, %v1291
        %v1652 = vpack.c.b16 %v1298, %v1292
        %v1653 = vpack.c.b16 %v1305, %v1299
        %v1654 = vpack.c.b16 %v1306, %v1300
        %v1655 = vpack.c.b16 %v1307, %v1301
        %v1656 = vpack.c.b16 %v1308, %v1302
        %v1657 = vpack.c.b16 %v1309, %v1303
        %v1658 = vpack.c.b16 %v1310, %v1304
        %v1659 = vpack.c.b16 %v1317, %v1311
        %v1660 = vpack.c.b16 %v1318, %v1312
        %v1661 = vpack.c.b16 %v1319, %v1313
        %v1662 = vpack.c.b16 %v1320, %v1314
        %v1663 = vpack.c.b16 %v1321, %v1315
        %v1664 = vpack.c.b16 %v1322, %v1316
        %v1665 = vpack.c.b16 %v1329, %v1323
        %v1666 = vpack.c.b16 %v1330, %v1324
        %v1667 = vpack.c.b16 %v1331, %v1325
        %v1668 = vpack.c.b16 %v1332, %v1326
        %v1669 = vpack.c.b16 %v1333, %v1327
        %v1670 = vpack.c.b16 %v1334, %v1328
        %v1671 = vpack.c.b16 %v1341, %v1335
        %v1672 = vpack.c.b16 %v1342, %v1336
        %v1673 = vpack.c.b16 %v1343, %v1337
        %v1674 = vpack.c.b16 %v1344, %v1338
        %v1675 = vpack.c.b16 %v1345, %v1339
        %v1676 = vpack.c.b16 %v1346, %v1340
        %v1677 = vpack.c.b16 %v1353, %v1347
        %v1678 = vpack.c.b16 %v1354, %v1348
        %v1679 = vpack.c.b16 %v1355, %v1349
        %v1680 = vpack.c.b16 %v1356, %v1350
        %v1681 = vpack.c.b16 %v1357, %v1351
        %v1682 = vpack.c.b16 %v1358, %v1352
        %v1683 = vpack.c.b16 %v1365, %v1359
        %v1684 = vpack.c.b16 %v1366, %v1360
        %v1685 = vpack.c.b16 %v1367, %v1361
        %v1686 = vpack.c.b16 %v1368, %v1362
        %v1687 = vpack.c.b16 %v1369, %v1363
        %v1688 = vpack.c.b16 %v1370, %v1364
        %v1689 = vpack.c.b16 %v1377, %v1371
        %v1690 = vpack.c.b16 %v1378, %v1372
        %v1691 = vpack.c.b16 %v1379, %v1373
        %v1692 = vpack.c.b16 %v1380, %v1374
        %v1693 = vpack.c.b16 %v1381, %v1375
        %v1694 = vpack.c.b16 %v1382, %v1376
        %v1695 = vpack.c.b16 %v1389, %v1383
        %v1696 = vpack.c.b16 %v1390, %v1384
        %v1697 = vpack.c.b16 %v1391, %v1385
        %v1698 = vpack.c.b16 %v1392, %v1386
        %v1699 = vpack.c.b16 %v1393, %v1387
        %v1700 = vpack.c.b16 %v1394, %v1388
        %v1701 = vpack.c.b16 %v1401, %v1395
        %v1702 = vpack.c.b16 %v1402, %v1396
        %v1703 = vpack.c.b16 %v1403, %v1397
        %v1704 = vpack.c.b16 %v1404, %v1398
        %v1705 = vpack.c.b16 %v1405, %v1399
        %v1706 = vpack.c.b16 %v1406, %v1400
        %v1707 = vpack.c.b16 %v1413, %v1407
        %v1708 = vpack.c.b16 %v1414, %v1408
        %v1709 = vpack.c.b16 %v1415, %v1409
        %v1710 = vpack.c.b16 %v1416, %v1410
        %v1711 = vpack.c.b16 %v1417, %v1411
        %v1712 = vpack.c.b16 %v1418, %v1412
        %v1713 = vpack.c.b16 %v1425, %v1419
        %v1714 = vpack.c.b16 %v1426, %v1420
        %v1715 = vpack.c.b16 %v1427, %v1421
        %v1716 = vpack.c.b16 %v1428, %v1422
        %v1717 = vpack.c.b16 %v1429, %v1423
        %v1718 = vpack.c.b16 %v1430, %v1424
        %2007 = vmatprep.subr.bf16.mxu0 %v1432
        %2008 = vmatpush1.bf16.msra.mxu0 %v1431
        %2009 = vmatprep.subr.bf16.mxu0 %v1438
        %2010 = vmatpush1.bf16.msra.mxu0 %v1437
        %2011 = vmatprep.subr.bf16.mxu0 %v1444
        %2012 = vmatpush1.bf16.msra.mxu0 %v1443
        %2013 = vmatprep.subr.bf16.mxu0 %v1450
        %2014 = vmatpush1.bf16.msra.mxu0 %v1449
        %2015 = vmatprep.subr.bf16.mxu0 %v1456
        %2016 = vmatpush1.bf16.msra.mxu0 %v1455
        %2017 = vmatprep.subr.bf16.mxu0 %v1462
        %2018 = vmatpush1.bf16.msra.mxu0 %v1461
        %2019 = vmatprep.subr.bf16.mxu0 %v1468
        %2020 = vmatpush1.bf16.msra.mxu0 %v1467
        %2021 = vmatprep.subr.bf16.mxu0 %v1474
        %2022 = vmatpush1.bf16.msra.mxu0 %v1473
        %2023 = vmatprep.subr.bf16.mxu0 %v1480
        %2024 = vmatpush1.bf16.msra.mxu0 %v1479
        %2025 = vmatprep.subr.bf16.mxu0 %v1486
        %2026 = vmatpush1.bf16.msra.mxu0 %v1485
        %2027 = vmatprep.subr.bf16.mxu0 %v1492
        %2028 = vmatpush1.bf16.msra.mxu0 %v1491
        %2029 = vmatprep.subr.bf16.mxu0 %v1498
        %2030 = vmatpush1.bf16.msra.mxu0 %v1497
        %2031 = vmatprep.subr.bf16.mxu0 %v1504
        %2032 = vmatpush1.bf16.msra.mxu0 %v1503
        %2033 = vmatprep.subr.bf16.mxu0 %v1510
        %2034 = vmatpush1.bf16.msra.mxu0 %v1509
        %2035 = vmatprep.subr.bf16.mxu0 %v1516
        %2036 = vmatpush1.bf16.msra.mxu0 %v1515
        %2037 = vmatprep.subr.bf16.mxu0 %v1522
        %2038 = vmatpush1.bf16.msra.mxu0 %v1521
        %2039 = vmatprep.mubr.bf16.mxu0 %v556
        %2040 = vmatmul.mubr.bf16.gmra.mrb[0].mxu0 %v555
        %v2041 = vpop.f32.mrb[0].mxu0
        %v2042 = vadd.f32 %v519, %v2041
        %v2043 = vpop.f32.mrb[0].mxu0
        %v2044 = vadd.f32 %v523, %v2043
        %v2045 = vpop.f32.mrb[0].mxu0
        %v2046 = vpop.f32.mrb[0].mxu0
        %2047 = vdwg.mxu0
        %2048 = vmatprep.subr.bf16.mxu0 %v1528
        %2049 = vmatpush1.bf16.msra.mxu0 %v1527
        %2050 = vmatprep.subr.bf16.mxu0 %v1534
        %2051 = vmatpush1.bf16.msra.mxu0 %v1533
        %2052 = vmatprep.subr.bf16.mxu0 %v1540
        %2053 = vmatpush1.bf16.msra.mxu0 %v1539
        %2054 = vmatprep.subr.bf16.mxu0 %v1546
        %2055 = vmatpush1.bf16.msra.mxu0 %v1545
        %2056 = vmatprep.subr.bf16.mxu0 %v1552
        %2057 = vmatpush1.bf16.msra.mxu0 %v1551
        %2058 = vmatprep.subr.bf16.mxu0 %v1558
        %2059 = vmatpush1.bf16.msra.mxu0 %v1557
        %2060 = vmatprep.subr.bf16.mxu0 %v1564
        %2061 = vmatpush1.bf16.msra.mxu0 %v1563
        %2062 = vmatprep.subr.bf16.mxu0 %v1570
        %2063 = vmatpush1.bf16.msra.mxu0 %v1569
        %2064 = vmatprep.subr.bf16.mxu0 %v1576
        %2065 = vmatpush1.bf16.msra.mxu0 %v1575
        %2066 = vmatprep.subr.bf16.mxu0 %v1582
        %2067 = vmatpush1.bf16.msra.mxu0 %v1581
        %2068 = vmatprep.subr.bf16.mxu0 %v1588
        %2069 = vmatpush1.bf16.msra.mxu0 %v1587
        %2070 = vmatprep.subr.bf16.mxu0 %v1594
        %2071 = vmatpush1.bf16.msra.mxu0 %v1593
        %2072 = vmatprep.subr.bf16.mxu0 %v1600
        %2073 = vmatpush1.bf16.msra.mxu0 %v1599
        %2074 = vmatprep.subr.bf16.mxu0 %v1606
        %2075 = vmatpush1.bf16.msra.mxu0 %v1605
        %2076 = vmatprep.subr.bf16.mxu0 %v1612
        %2077 = vmatpush1.bf16.msra.mxu0 %v1611
        %2078 = vmatprep.subr.bf16.mxu0 %v1618
        %2079 = vmatpush1.bf16.msra.mxu0 %v1617
        %2080 = vmatprep.mubr.bf16.mxu0 %v558
        %2081 = vmatmul.mubr.bf16.gmra.mrb[0].mxu0 %v557
        %v2082 = vpop.f32.mrb[0].mxu0
        %v2083 = vadd.f32 %v2042, %v2082
        %v2084 = vpop.f32.mrb[0].mxu0
        %v2085 = vadd.f32 %v2044, %v2084
        %v2086 = vpop.f32.mrb[0].mxu0
        %v2087 = vpop.f32.mrb[0].mxu0
        %2088 = vdwg.mxu0
        %2089 = vmatprep.subr.bf16.mxu0 %v1624
        %2090 = vmatpush1.bf16.msra.mxu0 %v1623
        %2091 = vmatprep.subr.bf16.mxu0 %v1630
        %2092 = vmatpush1.bf16.msra.mxu0 %v1629
        %2093 = vmatprep.subr.bf16.mxu0 %v1636
        %2094 = vmatpush1.bf16.msra.mxu0 %v1635
        %2095 = vmatprep.subr.bf16.mxu0 %v1642
        %2096 = vmatpush1.bf16.msra.mxu0 %v1641
        %2097 = vmatprep.subr.bf16.mxu0 %v1648
        %2098 = vmatpush1.bf16.msra.mxu0 %v1647
        %2099 = vmatprep.subr.bf16.mxu0 %v1654
        %2100 = vmatpush1.bf16.msra.mxu0 %v1653
        %2101 = vmatprep.subr.bf16.mxu0 %v1660
        %2102 = vmatpush1.bf16.msra.mxu0 %v1659
        %2103 = vmatprep.subr.bf16.mxu0 %v1666
        %2104 = vmatpush1.bf16.msra.mxu0 %v1665
        %2105 = vmatprep.subr.bf16.mxu0 %v1672
        %2106 = vmatpush1.bf16.msra.mxu0 %v1671
        %2107 = vmatprep.subr.bf16.mxu0 %v1678
        %2108 = vmatpush1.bf16.msra.mxu0 %v1677
        %2109 = vmatprep.subr.bf16.mxu0 %v1684
        %2110 = vmatpush1.bf16.msra.mxu0 %v1683
        %2111 = vmatprep.subr.bf16.mxu0 %v1690
        %2112 = vmatpush1.bf16.msra.mxu0 %v1689
        %2113 = vmatprep.subr.bf16.mxu0 %v1696
        %2114 = vmatpush1.bf16.msra.mxu0 %v1695
        %2115 = vmatprep.subr.bf16.mxu0 %v1702
        %2116 = vmatpush1.bf16.msra.mxu0 %v1701
        %2117 = vmatprep.subr.bf16.mxu0 %v1708
        %2118 = vmatpush1.bf16.msra.mxu0 %v1707
        %2119 = vmatprep.subr.bf16.mxu0 %v1714
        %2120 = vmatpush1.bf16.msra.mxu0 %v1713
        %2121 = vmatprep.mubr.bf16.mxu0 %v560
        %2122 = vmatmul.mubr.bf16.gmra.mrb[0].mxu0 %v559
        %v2123 = vpop.f32.mrb[0].mxu0
        %v2124 = vadd.f32 %v2083, %v2123
        %v2125 = vpop.f32.mrb[0].mxu0
        %v2126 = vadd.f32 %v2085, %v2125
        %v2127 = vpop.f32.mrb[0].mxu0
        %v2128 = vpop.f32.mrb[0].mxu0
        %2129 = vdwg.mxu0
        %2130 = vmatprep.subr.bf16.mxu0 %v1434
        %2131 = vmatpush1.bf16.msra.mxu0 %v1433
        %2132 = vmatprep.subr.bf16.mxu0 %v1440
        %2133 = vmatpush1.bf16.msra.mxu0 %v1439
        %2134 = vmatprep.subr.bf16.mxu0 %v1446
        %2135 = vmatpush1.bf16.msra.mxu0 %v1445
        %2136 = vmatprep.subr.bf16.mxu0 %v1452
        %2137 = vmatpush1.bf16.msra.mxu0 %v1451
        %2138 = vmatprep.subr.bf16.mxu0 %v1458
        %2139 = vmatpush1.bf16.msra.mxu0 %v1457
        %2140 = vmatprep.subr.bf16.mxu0 %v1464
        %2141 = vmatpush1.bf16.msra.mxu0 %v1463
        %2142 = vmatprep.subr.bf16.mxu0 %v1470
        %2143 = vmatpush1.bf16.msra.mxu0 %v1469
        %2144 = vmatprep.subr.bf16.mxu0 %v1476
        %2145 = vmatpush1.bf16.msra.mxu0 %v1475
        %2146 = vmatprep.subr.bf16.mxu0 %v1482
        %2147 = vmatpush1.bf16.msra.mxu0 %v1481
        %2148 = vmatprep.subr.bf16.mxu0 %v1488
        %2149 = vmatpush1.bf16.msra.mxu0 %v1487
        %2150 = vmatprep.subr.bf16.mxu0 %v1494
        %2151 = vmatpush1.bf16.msra.mxu0 %v1493
        %2152 = vmatprep.subr.bf16.mxu0 %v1500
        %2153 = vmatpush1.bf16.msra.mxu0 %v1499
        %2154 = vmatprep.subr.bf16.mxu0 %v1506
        %2155 = vmatpush1.bf16.msra.mxu0 %v1505
        %2156 = vmatprep.subr.bf16.mxu0 %v1512
        %2157 = vmatpush1.bf16.msra.mxu0 %v1511
        %2158 = vmatprep.subr.bf16.mxu0 %v1518
        %2159 = vmatpush1.bf16.msra.mxu0 %v1517
        %2160 = vmatprep.subr.bf16.mxu0 %v1524
        %2161 = vmatpush1.bf16.msra.mxu0 %v1523
        %2162 = vmatprep.mubr.bf16.mxu0 %v556
        %2163 = vmatmul.mubr.bf16.gmra.mrb[0].mxu0 %v555
        %v2164 = vpop.f32.mrb[0].mxu0
        %v2165 = vadd.f32 %v527, %v2164
        %v2166 = vpop.f32.mrb[0].mxu0
        %v2167 = vadd.f32 %v531, %v2166
        %v2168 = vpop.f32.mrb[0].mxu0
        %v2169 = vpop.f32.mrb[0].mxu0
        %2170 = vdwg.mxu0
        %2171 = vmatprep.subr.bf16.mxu0 %v1530
        %2172 = vmatpush1.bf16.msra.mxu0 %v1529
        %2173 = vmatprep.subr.bf16.mxu0 %v1536
        %2174 = vmatpush1.bf16.msra.mxu0 %v1535
        %2175 = vmatprep.subr.bf16.mxu0 %v1542
        %2176 = vmatpush1.bf16.msra.mxu0 %v1541
        %2177 = vmatprep.subr.bf16.mxu0 %v1548
        %2178 = vmatpush1.bf16.msra.mxu0 %v1547
        %2179 = vmatprep.subr.bf16.mxu0 %v1554
        %2180 = vmatpush1.bf16.msra.mxu0 %v1553
        %2181 = vmatprep.subr.bf16.mxu0 %v1560
        %2182 = vmatpush1.bf16.msra.mxu0 %v1559
        %2183 = vmatprep.subr.bf16.mxu0 %v1566
        %2184 = vmatpush1.bf16.msra.mxu0 %v1565
        %2185 = vmatprep.subr.bf16.mxu0 %v1572
        %2186 = vmatpush1.bf16.msra.mxu0 %v1571
        %2187 = vmatprep.subr.bf16.mxu0 %v1578
        %2188 = vmatpush1.bf16.msra.mxu0 %v1577
        %2189 = vmatprep.subr.bf16.mxu0 %v1584
        %2190 = vmatpush1.bf16.msra.mxu0 %v1583
        %2191 = vmatprep.subr.bf16.mxu0 %v1590
        %2192 = vmatpush1.bf16.msra.mxu0 %v1589
        %2193 = vmatprep.subr.bf16.mxu0 %v1596
        %2194 = vmatpush1.bf16.msra.mxu0 %v1595
        %2195 = vmatprep.subr.bf16.mxu0 %v1602
        %2196 = vmatpush1.bf16.msra.mxu0 %v1601
        %2197 = vmatprep.subr.bf16.mxu0 %v1608
        %2198 = vmatpush1.bf16.msra.mxu0 %v1607
        %2199 = vmatprep.subr.bf16.mxu0 %v1614
        %2200 = vmatpush1.bf16.msra.mxu0 %v1613
        %2201 = vmatprep.subr.bf16.mxu0 %v1620
        %2202 = vmatpush1.bf16.msra.mxu0 %v1619
        %2203 = vmatprep.mubr.bf16.mxu0 %v558
        %2204 = vmatmul.mubr.bf16.gmra.mrb[0].mxu0 %v557
        %v2205 = vpop.f32.mrb[0].mxu0
        %v2206 = vadd.f32 %v2165, %v2205
        %v2207 = vpop.f32.mrb[0].mxu0
        %v2208 = vadd.f32 %v2167, %v2207
        %v2209 = vpop.f32.mrb[0].mxu0
        %v2210 = vpop.f32.mrb[0].mxu0
        %2211 = vdwg.mxu0
        %2212 = vmatprep.subr.bf16.mxu0 %v1626
        %2213 = vmatpush1.bf16.msra.mxu0 %v1625
        %2214 = vmatprep.subr.bf16.mxu0 %v1632
        %2215 = vmatpush1.bf16.msra.mxu0 %v1631
        %2216 = vmatprep.subr.bf16.mxu0 %v1638
        %2217 = vmatpush1.bf16.msra.mxu0 %v1637
        %2218 = vmatprep.subr.bf16.mxu0 %v1644
        %2219 = vmatpush1.bf16.msra.mxu0 %v1643
        %2220 = vmatprep.subr.bf16.mxu0 %v1650
        %2221 = vmatpush1.bf16.msra.mxu0 %v1649
        %2222 = vmatprep.subr.bf16.mxu0 %v1656
        %2223 = vmatpush1.bf16.msra.mxu0 %v1655
        %2224 = vmatprep.subr.bf16.mxu0 %v1662
        %2225 = vmatpush1.bf16.msra.mxu0 %v1661
        %2226 = vmatprep.subr.bf16.mxu0 %v1668
        %2227 = vmatpush1.bf16.msra.mxu0 %v1667
        %2228 = vmatprep.subr.bf16.mxu0 %v1674
        %2229 = vmatpush1.bf16.msra.mxu0 %v1673
        %2230 = vmatprep.subr.bf16.mxu0 %v1680
        %2231 = vmatpush1.bf16.msra.mxu0 %v1679
        %2232 = vmatprep.subr.bf16.mxu0 %v1686
        %2233 = vmatpush1.bf16.msra.mxu0 %v1685
        %2234 = vmatprep.subr.bf16.mxu0 %v1692
        %2235 = vmatpush1.bf16.msra.mxu0 %v1691
        %2236 = vmatprep.subr.bf16.mxu0 %v1698
        %2237 = vmatpush1.bf16.msra.mxu0 %v1697
        %2238 = vmatprep.subr.bf16.mxu0 %v1704
        %2239 = vmatpush1.bf16.msra.mxu0 %v1703
        %2240 = vmatprep.subr.bf16.mxu0 %v1710
        %2241 = vmatpush1.bf16.msra.mxu0 %v1709
        %2242 = vmatprep.subr.bf16.mxu0 %v1716
        %2243 = vmatpush1.bf16.msra.mxu0 %v1715
        %2244 = vmatprep.mubr.bf16.mxu0 %v560
        %2245 = vmatmul.mubr.bf16.gmra.mrb[0].mxu0 %v559
        %v2246 = vpop.f32.mrb[0].mxu0
        %v2247 = vadd.f32 %v2206, %v2246
        %v2248 = vpop.f32.mrb[0].mxu0
        %v2249 = vadd.f32 %v2208, %v2248
        %v2250 = vpop.f32.mrb[0].mxu0
        %v2251 = vpop.f32.mrb[0].mxu0
        %2252 = vdwg.mxu0
        %2253 = vmatprep.subr.bf16.mxu0 %v1436
        %2254 = vmatpush1.bf16.msra.mxu0 %v1435
        %2255 = vmatprep.subr.bf16.mxu0 %v1442
        %2256 = vmatpush1.bf16.msra.mxu0 %v1441
        %2257 = vmatprep.subr.bf16.mxu0 %v1448
        %2258 = vmatpush1.bf16.msra.mxu0 %v1447
        %2259 = vmatprep.subr.bf16.mxu0 %v1454
        %2260 = vmatpush1.bf16.msra.mxu0 %v1453
        %2261 = vmatprep.subr.bf16.mxu0 %v1460
        %2262 = vmatpush1.bf16.msra.mxu0 %v1459
        %2263 = vmatprep.subr.bf16.mxu0 %v1466
        %2264 = vmatpush1.bf16.msra.mxu0 %v1465
        %2265 = vmatprep.subr.bf16.mxu0 %v1472
        %2266 = vmatpush1.bf16.msra.mxu0 %v1471
        %2267 = vmatprep.subr.bf16.mxu0 %v1478
        %2268 = vmatpush1.bf16.msra.mxu0 %v1477
        %2269 = vmatprep.subr.bf16.mxu0 %v1484
        %2270 = vmatpush1.bf16.msra.mxu0 %v1483
        %2271 = vmatprep.subr.bf16.mxu0 %v1490
        %2272 = vmatpush1.bf16.msra.mxu0 %v1489
        %2273 = vmatprep.subr.bf16.mxu0 %v1496
        %2274 = vmatpush1.bf16.msra.mxu0 %v1495
        %2275 = vmatprep.subr.bf16.mxu0 %v1502
        %2276 = vmatpush1.bf16.msra.mxu0 %v1501
        %2277 = vmatprep.subr.bf16.mxu0 %v1508
        %2278 = vmatpush1.bf16.msra.mxu0 %v1507
        %2279 = vmatprep.subr.bf16.mxu0 %v1514
        %2280 = vmatpush1.bf16.msra.mxu0 %v1513
        %2281 = vmatprep.subr.bf16.mxu0 %v1520
        %2282 = vmatpush1.bf16.msra.mxu0 %v1519
        %2283 = vmatprep.subr.bf16.mxu0 %v1526
        %2284 = vmatpush1.bf16.msra.mxu0 %v1525
        %2285 = vmatprep.mubr.bf16.mxu0 %v556
        %2286 = vmatmul.mubr.bf16.gmra.mrb[0].mxu0 %v555
        %v2287 = vpop.f32.mrb[0].mxu0
        %v2288 = vadd.f32 %v535, %v2287
        %v2289 = vpop.f32.mrb[0].mxu0
        %v2290 = vadd.f32 %v539, %v2289
        %v2291 = vpop.f32.mrb[0].mxu0
        %v2292 = vpop.f32.mrb[0].mxu0
        %2293 = vdwg.mxu0
        %2294 = vmatprep.subr.bf16.mxu0 %v1532
        %2295 = vmatpush1.bf16.msra.mxu0 %v1531
        %2296 = vmatprep.subr.bf16.mxu0 %v1538
        %2297 = vmatpush1.bf16.msra.mxu0 %v1537
        %2298 = vmatprep.subr.bf16.mxu0 %v1544
        %2299 = vmatpush1.bf16.msra.mxu0 %v1543
        %2300 = vmatprep.subr.bf16.mxu0 %v1550
        %2301 = vmatpush1.bf16.msra.mxu0 %v1549
        %2302 = vmatprep.subr.bf16.mxu0 %v1556
        %2303 = vmatpush1.bf16.msra.mxu0 %v1555
        %2304 = vmatprep.subr.bf16.mxu0 %v1562
        %2305 = vmatpush1.bf16.msra.mxu0 %v1561
        %2306 = vmatprep.subr.bf16.mxu0 %v1568
        %2307 = vmatpush1.bf16.msra.mxu0 %v1567
        %2308 = vmatprep.subr.bf16.mxu0 %v1574
        %2309 = vmatpush1.bf16.msra.mxu0 %v1573
        %2310 = vmatprep.subr.bf16.mxu0 %v1580
        %2311 = vmatpush1.bf16.msra.mxu0 %v1579
        %2312 = vmatprep.subr.bf16.mxu0 %v1586
        %2313 = vmatpush1.bf16.msra.mxu0 %v1585
        %2314 = vmatprep.subr.bf16.mxu0 %v1592
        %2315 = vmatpush1.bf16.msra.mxu0 %v1591
        %2316 = vmatprep.subr.bf16.mxu0 %v1598
        %2317 = vmatpush1.bf16.msra.mxu0 %v1597
        %2318 = vmatprep.subr.bf16.mxu0 %v1604
        %2319 = vmatpush1.bf16.msra.mxu0 %v1603
        %2320 = vmatprep.subr.bf16.mxu0 %v1610
        %2321 = vmatpush1.bf16.msra.mxu0 %v1609
        %2322 = vmatprep.subr.bf16.mxu0 %v1616
        %2323 = vmatpush1.bf16.msra.mxu0 %v1615
        %2324 = vmatprep.subr.bf16.mxu0 %v1622
        %2325 = vmatpush1.bf16.msra.mxu0 %v1621
        %2326 = vmatprep.mubr.bf16.mxu0 %v558
        %2327 = vmatmul.mubr.bf16.gmra.mrb[0].mxu0 %v557
        %v2328 = vpop.f32.mrb[0].mxu0
        %v2329 = vadd.f32 %v2288, %v2328
        %v2330 = vpop.f32.mrb[0].mxu0
        %v2331 = vadd.f32 %v2290, %v2330
        %v2332 = vpop.f32.mrb[0].mxu0
        %v2333 = vpop.f32.mrb[0].mxu0
        %2334 = vdwg.mxu0
        %2335 = vmatprep.subr.bf16.mxu0 %v1628
        %2336 = vmatpush1.bf16.msra.mxu0 %v1627
        %2337 = vmatprep.subr.bf16.mxu0 %v1634
        %2338 = vmatpush1.bf16.msra.mxu0 %v1633
        %2339 = vmatprep.subr.bf16.mxu0 %v1640
        %2340 = vmatpush1.bf16.msra.mxu0 %v1639
        %2341 = vmatprep.subr.bf16.mxu0 %v1646
        %2342 = vmatpush1.bf16.msra.mxu0 %v1645
        %2343 = vmatprep.subr.bf16.mxu0 %v1652
        %2344 = vmatpush1.bf16.msra.mxu0 %v1651
        %2345 = vmatprep.subr.bf16.mxu0 %v1658
        %2346 = vmatpush1.bf16.msra.mxu0 %v1657
        %2347 = vmatprep.subr.bf16.mxu0 %v1664
        %2348 = vmatpush1.bf16.msra.mxu0 %v1663
        %2349 = vmatprep.subr.bf16.mxu0 %v1670
        %2350 = vmatpush1.bf16.msra.mxu0 %v1669
        %2351 = vmatprep.subr.bf16.mxu0 %v1676
        %2352 = vmatpush1.bf16.msra.mxu0 %v1675
        %2353 = vmatprep.subr.bf16.mxu0 %v1682
        %2354 = vmatpush1.bf16.msra.mxu0 %v1681
        %2355 = vmatprep.subr.bf16.mxu0 %v1688
        %2356 = vmatpush1.bf16.msra.mxu0 %v1687
        %2357 = vmatprep.subr.bf16.mxu0 %v1694
        %2358 = vmatpush1.bf16.msra.mxu0 %v1693
        %2359 = vmatprep.subr.bf16.mxu0 %v1700
        %2360 = vmatpush1.bf16.msra.mxu0 %v1699
        %2361 = vmatprep.subr.bf16.mxu0 %v1706
        %2362 = vmatpush1.bf16.msra.mxu0 %v1705
        %2363 = vmatprep.subr.bf16.mxu0 %v1712
        %2364 = vmatpush1.bf16.msra.mxu0 %v1711
        %2365 = vmatprep.subr.bf16.mxu0 %v1718
        %2366 = vmatpush1.bf16.msra.mxu0 %v1717
        %2367 = vmatprep.mubr.bf16.mxu0 %v560
        %2368 = vmatmul.mubr.bf16.gmra.mrb[0].mxu0 %v559
        %v2369 = vpop.f32.mrb[0].mxu0
        %v2370 = vadd.f32 %v2329, %v2369
        %v2371 = vpop.f32.mrb[0].mxu0
        %v2372 = vadd.f32 %v2331, %v2371
        %v2373 = vpop.f32.mrb[0].mxu0
        %v2374 = vpop.f32.mrb[0].mxu0
        %2375 = vdwg.mxu0
        %v2376 = vmul.f32 %v2124, 0.5
        %v2377 = vmul.f32 %v2126, 0.5
        %v2378 = vmul.f32 %v2247, 0.5
        %v2379 = vmul.f32 %v2249, 0.5
        %v2380 = vmul.f32 %v2370, 0.5
        %v2381 = vmul.f32 %v2372, 0.5
        %v2382 = vmul.f32 %v2124, 0.70710677
        %v2383 = vmul.f32 %v2126, 0.70710677
        %v2384 = vmul.f32 %v2247, 0.70710677
        %v2385 = vmul.f32 %v2249, 0.70710677
        %v2386 = vmul.f32 %v2370, 0.70710677
        %v2387 = vmul.f32 %v2372, 0.70710677
        %v2388 = verf.f32.pop %v2382
        %v2389 = verf.f32.pop %v2383
        %v2390 = verf.f32.pop %v2384
        %v2391 = verf.f32.pop %v2385
        %v2392 = verf.f32.pop %v2386
        %v2393 = verf.f32.pop %v2387
        %v2394 = vadd.f32 %v2388, 1.0
        %v2395 = vadd.f32 %v2389, 1.0
        %v2396 = vadd.f32 %v2390, 1.0
        %v2397 = vadd.f32 %v2391, 1.0
        %v2398 = vadd.f32 %v2392, 1.0
        %v2399 = vadd.f32 %v2393, 1.0
        %v2400 = vmul.f32 %v2376, %v2394
        %v2401 = vmul.f32 %v2377, %v2395
        %v2402 = vmul.f32 %v2378, %v2396
        %v2403 = vmul.f32 %v2379, %v2397
        %v2404 = vmul.f32 %v2380, %v2398
        %v2405 = vmul.f32 %v2381, %v2399
        %v2406 = vadd.f32 %v2400, %v2401
        %v2407 = vadd.f32 %v2406, %v2402
        %v2408 = vadd.f32 %v2407, %v2403
        %v2409 = vadd.f32 %v2408, %v2404
        %v2410 = vadd.f32 %v2409, %v2405
        %2411 = vadd.xlane.f32.xlu0 %v2410
        %v2412 = vpop.xlane.xlu0 %2411
        %v2413 = vrcp.pop 768.0
        %v2414 = vmul.f32 %v2412, %v2413
        %v2415 = vmul.f32 %v2400, %v2400
        %v2416 = vmul.f32 %v2401, %v2401
        %v2417 = vmul.f32 %v2402, %v2402
        %v2418 = vmul.f32 %v2403, %v2403
        %v2419 = vmul.f32 %v2404, %v2404
        %v2420 = vmul.f32 %v2405, %v2405
        %v2421 = vadd.f32 %v2415, %v2416
        %v2422 = vadd.f32 %v2421, %v2417
        %v2423 = vadd.f32 %v2422, %v2418
        %v2424 = vadd.f32 %v2423, %v2419
        %v2425 = vadd.f32 %v2424, %v2420
        %2426 = vadd.xlane.f32.xlu0 %v2425
        %v2427 = vpop.xlane.xlu0 %2426
        %v2428 = vmul.f32 %v2427, %v2413
        %v2429 = vmul.f32 %v2414, %v2414
        %v2430 = vsub.f32 %v2428, %v2429
        %v2431 = vmax.f32 %v2430, 0.0
        %v2432 = vadd.f32 %v2431, 1e-12
        %v2433 = vrsqrt.pop %v2432
        %v2434 = vsub.f32 %v2400, %v2414
        %v2435 = vsub.f32 %v2401, %v2414
        %v2436 = vsub.f32 %v2402, %v2414
        %v2437 = vsub.f32 %v2403, %v2414
        %v2438 = vsub.f32 %v2404, %v2414
        %v2439 = vsub.f32 %v2405, %v2414
        %v2440 = vmul.f32 %v2434, %v2433
        %v2441 = vmul.f32 %v2435, %v2433
        %v2442 = vmul.f32 %v2436, %v2433
        %v2443 = vmul.f32 %v2437, %v2433
        %v2444 = vmul.f32 %v2438, %v2433
        %v2445 = vmul.f32 %v2439, %v2433
        %v2446 = vld [vmem:[%s3] sm:$0x3f]
        %v2448 = vlaneseq
        %v2449 = vshrl.u32 %v2448, 7
        %v2450 = vsub.s32 0, %v2449
        %v2451 = vrot.slane %v2446, %v2450
        %v2452 = vlaneseq
        %v2453 = vshrl.u32 %v2452, 7
        %v2454 = vsub.s32 1, %v2453
        %v2455 = vrot.slane %v2446, %v2454
        %v2456 = vlaneseq
        %v2457 = vshrl.u32 %v2456, 7
        %v2458 = vsub.s32 2, %v2457
        %v2459 = vrot.slane %v2446, %v2458
        %v2460 = vlaneseq
        %v2461 = vshrl.u32 %v2460, 7
        %v2462 = vsub.s32 3, %v2461
        %v2463 = vrot.slane %v2446, %v2462
        %v2464 = vlaneseq
        %v2465 = vshrl.u32 %v2464, 7
        %v2466 = vsub.s32 4, %v2465
        %v2467 = vrot.slane %v2446, %v2466
        %v2468 = vlaneseq
        %v2469 = vshrl.u32 %v2468, 7
        %v2470 = vsub.s32 5, %v2469
        %v2471 = vrot.slane %v2446, %v2470
        %v2478 = vmul.f32 %v2440, %v2451
        %v2479 = vmul.f32 %v2441, %v2455
        %v2480 = vmul.f32 %v2442, %v2459
        %v2481 = vmul.f32 %v2443, %v2463
        %v2482 = vmul.f32 %v2444, %v2467
        %v2483 = vmul.f32 %v2445, %v2471
        %v2484 = vld [vmem:[%s4] sm:$0x3f]
        %v2486 = vlaneseq
        %v2487 = vshrl.u32 %v2486, 7
        %v2488 = vsub.s32 0, %v2487
        %v2489 = vrot.slane %v2484, %v2488
        %v2490 = vlaneseq
        %v2491 = vshrl.u32 %v2490, 7
        %v2492 = vsub.s32 1, %v2491
        %v2493 = vrot.slane %v2484, %v2492
        %v2494 = vlaneseq
        %v2495 = vshrl.u32 %v2494, 7
        %v2496 = vsub.s32 2, %v2495
        %v2497 = vrot.slane %v2484, %v2496
        %v2498 = vlaneseq
        %v2499 = vshrl.u32 %v2498, 7
        %v2500 = vsub.s32 3, %v2499
        %v2501 = vrot.slane %v2484, %v2500
        %v2502 = vlaneseq
        %v2503 = vshrl.u32 %v2502, 7
        %v2504 = vsub.s32 4, %v2503
        %v2505 = vrot.slane %v2484, %v2504
        %v2506 = vlaneseq
        %v2507 = vshrl.u32 %v2506, 7
        %v2508 = vsub.s32 5, %v2507
        %v2509 = vrot.slane %v2484, %v2508
        %v2516 = vadd.f32 %v2478, %v2489
        %v2517 = vadd.f32 %v2479, %v2493
        %v2518 = vadd.f32 %v2480, %v2497
        %v2519 = vadd.f32 %v2481, %v2501
        %v2520 = vadd.f32 %v2482, %v2505
        %v2521 = vadd.f32 %v2483, %v2509
        %2522 = vst [vmem:[%s217] sm:$0xff] %v2516
        %2523 = vst [vmem:[%s217 + $0x8] sm:$0xff] %v2517
        %2524 = vst [vmem:[%s217 + $0x10] sm:$0xff] %v2518
        %2525 = vst [vmem:[%s217 + $0x18] sm:$0xff] %v2519
        %2526 = vst [vmem:[%s217 + $0x20] sm:$0xff] %v2520
        %2527 = vst [vmem:[%s217 + $0x28] sm:$0xff] %v2521
        %s2528 = sand.u32 %s137, 1
        %s2529 = scalar_lea.sflag [#allocation3], %s2528
        %s2530 = sand.u32 %s137, 1
        %s2531 = smul.addr %s2530, 48
        %s2532 = scalar_lea.vmem [#allocation2], %s2531
        // Predicated region
        $region41: #{bert_prediction_head_transform.1} parent=39 // pred_check
          %p2533 = pneg %p147
        $region42: #{bert_prediction_head_transform.1} parent=39 // pred_check_branch
          %2535 = sbr.rel (%p2533) target = $region44
        $region43: #{bert_prediction_head_transform.1} parent=39 // pred_region
          %s2537 = ssub.s32 768, 768
          %2538 = vsyncadd %s2529, %s2537
          %s2539 = smul.addr %s19, 6
          %s2540 = smul.addr %s2539, 128
          %s2541 = scalar_lea.hbm %s5, %s2540
          %s2543 = sshll.u32 %s2532, 4
          %s2544 = int_to_ptr.vmem [resolvable:$true] %s2543
          %2546 = dma.vmem_to_hbm [thread:$0]  %s2544, 768, %s2541, %s2529
        $region44: #{bert_prediction_head_transform.1} parent=39 // pred_fallthru
          _
      $region40: #{bert_prediction_head_transform.1} parent=5 // pred_fallthru
        _
      %p2547 = scmp.le.s32.totalorder 2, %s14
      // Predicated region
      $region45: #{bert_prediction_head_transform.1} parent=5 // pred_check
        %p2548 = pneg %p2547
      $region46: #{bert_prediction_head_transform.1} parent=5 // pred_check_branch
        %2550 = sbr.rel (%p2548) target = $region48
      $region47: #{bert_prediction_head_transform.1} parent=5 // pred_region
        %s2551 = ssub.s32 %s14, 2
        // Predicated region
        $region49: #{bert_prediction_head_transform.1} parent=47 // pred_check
          %p2552 = pneg %p153
        $region50: #{bert_prediction_head_transform.1} parent=47 // pred_check_branch
          %2554 = sbr.rel (%p2552) target = $region52
        $region51: #{bert_prediction_head_transform.1} parent=47 // pred_region
          %s2555 = sand.u32 %s138, 1
          %s2556 = scalar_lea.sflag [#allocation3], %s2555
          %s2557 = sand.u32 %s138, 1
          %s2558 = smul.addr %s2557, 48
          %s2559 = scalar_lea.vmem [#allocation2], %s2558
          %2560 = dma.done %s2556, 768
        $region52: #{bert_prediction_head_transform.1} parent=47 // pred_fallthru
          _
      $region48: #{bert_prediction_head_transform.1} parent=5 // pred_fallthru
        _
    $region6: #{bert_prediction_head_transform.1} parent=1 // loop_footer
      %s18 = sadd.s32 1, %s14
    $region7: #{bert_prediction_head_transform.1} parent=1 // loop_footer_branch
      %13 = sbr.rel target = $region3
    $region8: #{bert_prediction_head_transform.1} parent=1 // loop_exit
      _
    %2561 = vsyncpa [#allocation3], 1
    %s2562 = scalar_lea.sflag [#allocation3], 1
    %2563 = vsyncpa %s2562, 1

</llo_original>
